<compile_context>
chip_gen: v5e
topology: v5e:2x2
jax: 0.10.0
libtpu: 0.0.40
codegen_flags: <defaults>
</compile_context>

<pallas_src>
import jax
import jax.numpy as jnp
from jax.experimental import pallas as pl
from jax.experimental.pallas import tpu as pltpu


def _lstm_layer_kernel(gx_ref, whh_ref, h0_ref, c0_ref, out_ref, h_ref, c_ref):
    """Full-sequence recurrence for ONE direction of one LSTM layer.

    Kernel views (the leading direction axis is squeezed by the BlockSpecs):
      gx_ref  : (S, B, 4H)  precomputed x_t @ W_ih^T + (b_ih + b_hh), resident
      whh_ref : (H, 4H)     W_hh^T for this direction
      h0/c0   : (B, H)      initial state for this direction
      out_ref : (S, B, H)   per-time-step hidden states (resident)
      h_ref   : (B, H)      final hidden state (written once)
      c_ref   : (B, H)      final cell state   (written once)
    """
    d = pl.program_id(0)
    S = gx_ref.shape[0]
    H = h_ref.shape[-1]

    # Pure scalar-unit time indexing (no vector select on the per-step path):
    #   forward  (d == 0): time_idx = t
    #   backward (d == 1): time_idx = S - 1 - t
    base = (S - 1) * d
    sign = 1 - 2 * d

    def step(t, carry):
        h, c = carry
        time_idx = base + sign * t

        gates = gx_ref[time_idx] + jnp.dot(
            h, whh_ref[...], preferred_element_type=jnp.float32)   # (B, 4H)

        # Whole-tile nonlinearities, then slice.  PyTorch gate order: i, f, g, o.
        sig = jax.nn.sigmoid(gates)
        tan = jnp.tanh(gates)
        i_g = sig[:, 0 * H:1 * H]
        f_g = sig[:, 1 * H:2 * H]
        g_g = tan[:, 2 * H:3 * H]
        o_g = sig[:, 3 * H:4 * H]

        c_new = f_g * c + i_g * g_g
        h_new = o_g * jnp.tanh(c_new)

        out_ref[time_idx] = h_new.astype(out_ref.dtype)
        return (h_new, c_new)

    # S is small and static here -> fully unroll so the LLO scheduler sees the
    # whole chain and (h, c) stay in vregs across steps.
    h_fin, c_fin = jax.lax.fori_loop(
        0, S, step, (h0_ref[...], c0_ref[...]), unroll=True)

    h_ref[...] = h_fin
    c_ref[...] = c_fin


def _layer_preactivations(layer_in, w_ih, b_ih, b_hh):
    """Hoisted input projection for all time steps and all directions.

    layer_in : (S, B, E) for the first layer, or (D_prev, S, B, H_prev) for
               deeper layers (direction-major output of the previous layer,
               consumed directly — no transpose/concat pass between layers).
    Returns gx : (D, S, B, 4H) in f32.
    """
    w_ih = w_ih.astype(jnp.float32)
    bias = (b_ih + b_hh).astype(jnp.float32)
    if layer_in.ndim == 3:
        gx = jnp.einsum("sbe,dge->dsbg", layer_in.astype(jnp.float32), w_ih)
    else:
        Dp, _, _, Hp = layer_in.shape
        # e = f * H_prev + h  (forward features first, then backward) — split
        # the weight's input dim so the previous layer's (D,S,B,H) output is
        # used as-is.
        w4 = w_ih.reshape(w_ih.shape[0], w_ih.shape[1], Dp, Hp)
        gx = jnp.einsum("fsbh,dgfh->dsbg", layer_in, w4)
    return gx + bias[:, None, None, :]


def run_lstm_layer(layer_in, w_ih, w_hh, b_ih, b_hh, h0, c0):
    """Run all directions of one LSTM layer over the full sequence.

    layer_in : (S, B, E) or (D_prev, S, B, H_prev)
    w_ih     : (D, 4H, In); w_hh: (D, 4H, H); b_ih, b_hh: (D, 4H)
    h0, c0   : (D, B, H)
    Returns (out (D, S, B, H), hT (D, B, H), cT (D, B, H)).
    """
    D, fourH, H = w_hh.shape

    gx = _layer_preactivations(layer_in, w_ih, b_ih, b_hh)          # (D,S,B,4H)
    _, S, B, _ = gx.shape
    whh_t = jnp.transpose(w_hh, (0, 2, 1)).astype(jnp.float32)      # (D,H,4H)

    out_shapes = (
        jax.ShapeDtypeStruct((D, S, B, H), jnp.float32),   # per-step outputs
        jax.ShapeDtypeStruct((D, B, H), jnp.float32),      # final h
        jax.ShapeDtypeStruct((D, B, H), jnp.float32),      # final c
    )
    in_specs = [
        pl.BlockSpec((None, S, B, fourH), lambda d: (d, 0, 0, 0)),  # gx slab
        pl.BlockSpec((None, H, fourH), lambda d: (d, 0, 0)),        # W_hh^T
        pl.BlockSpec((None, B, H), lambda d: (d, 0, 0)),            # h0
        pl.BlockSpec((None, B, H), lambda d: (d, 0, 0)),            # c0
    ]
    out_specs = (
        pl.BlockSpec((None, S, B, H), lambda d: (d, 0, 0, 0)),      # outputs
        pl.BlockSpec((None, B, H), lambda d: (d, 0, 0)),            # hT
        pl.BlockSpec((None, B, H), lambda d: (d, 0, 0)),            # cT
    )

    out, hT, cT = pl.pallas_call(
        _lstm_layer_kernel,
        out_shape=out_shapes,
        grid=(D,),
        in_specs=in_specs,
        out_specs=out_specs,
        compiler_params=pltpu.CompilerParams(
            dimension_semantics=("parallel",)),
    )(gx, whh_t, h0.astype(jnp.float32), c0.astype(jnp.float32))

    return out, hT, cT


def init_encoder_params(key, embedding_dim, hidden_dim, n_layers, bidir):
    """Deterministic nn.LSTM-shaped parameters, stacked over directions.

    hidden_dim is the module arg; effective per-direction hidden size is
    hidden_dim // 2 if bidir else hidden_dim (matches Encoder.__init__).
    """
    H = hidden_dim // 2 if bidir else hidden_dim
    D = 2 if bidir else 1
    params = []
    for layer in range(n_layers):
        in_size = embedding_dim if layer == 0 else H * D
        key, k1, k2, k3, k4 = jax.random.split(key, 5)
        scale = 0.1
        params.append(dict(
            w_ih=jax.random.uniform(k1, (D, 4 * H, in_size), jnp.float32,
                                    -scale, scale),
            w_hh=jax.random.uniform(k2, (D, 4 * H, H), jnp.float32,
                                    -scale, scale),
            b_ih=jax.random.uniform(k3, (D, 4 * H), jnp.float32,
                                    -scale, scale),
            b_hh=jax.random.uniform(k4, (D, 4 * H), jnp.float32,
                                    -scale, scale),
        ))
    return params, H, D


def encoder_forward(embedded_inputs, hidden, params, n_layers, bidir):
    """Mirror of Encoder.forward.

    embedded_inputs : (batch, seq, embedding_dim)   (batch-first).
    hidden          : (h0, c0), each (n_layers*num_dirs, batch, H).
    Returns (outputs (batch, seq, num_dirs*H), (hN, cN)).
    """
    h0_all, c0_all = hidden
    D = 2 if bidir else 1

    # embedded_inputs.permute(1, 0, 2) -> time-major, like nn.LSTM internally.
    x = jnp.transpose(embedded_inputs, (1, 0, 2))   # (S, B, E)

    h_finals, c_finals = [], []
    layer_in = x
    for layer in range(n_layers):
        p = params[layer]
        h0 = h0_all[layer * D:(layer + 1) * D]
        c0 = c0_all[layer * D:(layer + 1) * D]
        layer_in, hT, cT = run_lstm_layer(
            layer_in, p["w_ih"], p["w_hh"], p["b_ih"], p["b_hh"], h0, c0)
        h_finals.append(hT)
        c_finals.append(cT)
        # TODO(synk): nn.LSTM inter-layer dropout (training mode only) is not
        # applied here; this corresponds to eval / dropout=0.

    # (D, S, B, H) -> (B, S, D*H): single final layout pass, equivalent to the
    # module's outputs.permute(1, 0, 2) on the concatenated-direction output.
    Dn, S, B, H = layer_in.shape
    outputs = jnp.transpose(layer_in, (2, 1, 0, 3)).reshape(B, S, Dn * H)
    hN = jnp.concatenate(h_finals, axis=0)
    cN = jnp.concatenate(c_finals, axis=0)
    return outputs, (hN, cN)


def _reference_forward(embedded_inputs, hidden, params, n_layers, bidir):
    """Pure-JAX (lax.scan) reference of the same LSTM, for a sanity check."""
    h0_all, c0_all = hidden
    D = 2 if bidir else 1
    x = jnp.transpose(embedded_inputs, (1, 0, 2))
    layer_in = x
    h_f, c_f = [], []
    for layer in range(n_layers):
        p = params[layer]
        dir_outs = []
        for d in range(D):
            idx = layer * D + d
            xin = layer_in if d == 0 else layer_in[::-1]
            w_ih, w_hh = p["w_ih"][d], p["w_hh"][d]
            bias = p["b_ih"][d] + p["b_hh"][d]
            H = w_hh.shape[-1]

            def step(carry, x_t, w_ih=w_ih, w_hh=w_hh, bias=bias, H=H):
                h, c = carry
                gates = x_t @ w_ih.T + h @ w_hh.T + bias
                i = jax.nn.sigmoid(gates[:, 0 * H:1 * H])
                f = jax.nn.sigmoid(gates[:, 1 * H:2 * H])
                g = jnp.tanh(gates[:, 2 * H:3 * H])
                o = jax.nn.sigmoid(gates[:, 3 * H:4 * H])
                c = f * c + i * g
                h = o * jnp.tanh(c)
                return (h, c), h

            (hT, cT), out = jax.lax.scan(step, (h0_all[idx], c0_all[idx]), xin)
            if d == 1:
                out = out[::-1]
            dir_outs.append(out)
            h_f.append(hT)
            c_f.append(cT)
        layer_in = jnp.concatenate(dir_outs, axis=-1)
    return (jnp.transpose(layer_in, (1, 0, 2)),
            (jnp.stack(h_f, 0), jnp.stack(c_f, 0)))


if __name__ == "__main__":
    # Encoder(embedding_dim=32, hidden_dim=32, n_layers=2, dropout=0.0, bidir=True)
    embedding_dim = 32
    hidden_dim = 32
    n_layers = 2
    bidir = True

    batch = 2
    seq = 8

    key = jax.random.PRNGKey(0)
    key, kp, kx = jax.random.split(key, 3)
    params, H, num_dirs = init_encoder_params(
        kp, embedding_dim, hidden_dim, n_layers, bidir)

    embedded_inputs = jax.random.normal(
        kx, (batch, seq, embedding_dim), jnp.float32)
    h0 = jnp.zeros((n_layers * num_dirs, batch, H), jnp.float32)
    c0 = jnp.zeros((n_layers * num_dirs, batch, H), jnp.float32)

    outputs, (hN, cN) = encoder_forward(
        embedded_inputs, (h0, c0), params, n_layers, bidir)
    jax.block_until_ready((outputs, hN, cN))

    # Sanity check against pure-JAX reference.
    ref_out, (ref_h, ref_c) = _reference_forward(
        embedded_inputs, (h0, c0), params, n_layers, bidir)
    assert outputs.shape == (batch, seq, num_dirs * H)
    assert hN.shape == (n_layers * num_dirs, batch, H)
    assert jnp.allclose(outputs, ref_out, atol=1e-5)
    assert jnp.allclose(hN, ref_h, atol=1e-5)
    assert jnp.allclose(cN, ref_c, atol=1e-5)

    print("KERNEL_OK")
</pallas_src>

<mosaic_0001>
module attributes {stable_mosaic.version = 11 : i64} {
  func.func @_lstm_layer_kernel(%arg0: i32, %arg1: memref<1x8x2x64xf32, #tpu.memory_space<vmem>>, %arg2: memref<1x16x64xf32, #tpu.memory_space<vmem>>, %arg3: memref<1x2x16xf32, #tpu.memory_space<vmem>>, %arg4: memref<1x2x16xf32, #tpu.memory_space<vmem>>, %arg5: memref<1x8x2x16xf32, #tpu.memory_space<vmem>>, %arg6: memref<1x2x16xf32, #tpu.memory_space<vmem>>, %arg7: memref<1x2x16xf32, #tpu.memory_space<vmem>>) attributes {dimension_semantics = [#tpu.dimension_semantics<parallel>], iteration_bounds = array<i64: 2>, scalar_prefetch = 0 : i64, scratch_operands = 0 : i64, tpu.core_type = #tpu.core_type<tc>, window_params = [{transform_indices = @transform_0, window_bounds = array<i64: 1, 8, 2, 64>}, {transform_indices = @transform_1, window_bounds = array<i64: 1, 16, 64>}, {transform_indices = @transform_2, window_bounds = array<i64: 1, 2, 16>}, {transform_indices = @transform_3, window_bounds = array<i64: 1, 2, 16>}, {transform_indices = @transform_4, window_bounds = array<i64: 1, 8, 2, 16>}, {transform_indices = @transform_5, window_bounds = array<i64: 1, 2, 16>}, {transform_indices = @transform_6, window_bounds = array<i64: 1, 2, 16>}]} {
    %c7_i32 = arith.constant 7 : i32
    %0 = arith.muli %c7_i32, %arg0 : i32
    %c2_i32 = arith.constant 2 : i32
    %1 = arith.muli %c2_i32, %arg0 : i32
    %c1_i32 = arith.constant 1 : i32
    %2 = arith.subi %c1_i32, %1 : i32
    %c0 = arith.constant 0 : index
    %c0_0 = arith.constant 0 : index
    %c0_1 = arith.constant 0 : index
    %3 = vector.load %arg3[%c0, %c0_0, %c0_1] : memref<1x2x16xf32, #tpu.memory_space<vmem>>, vector<1x2x16xf32>
    %4 = vector.shape_cast %3 : vector<1x2x16xf32> to vector<2x16xf32>
    %c0_2 = arith.constant 0 : index
    %c0_3 = arith.constant 0 : index
    %c0_4 = arith.constant 0 : index
    %5 = vector.load %arg4[%c0_2, %c0_3, %c0_4] : memref<1x2x16xf32, #tpu.memory_space<vmem>>, vector<1x2x16xf32>
    %6 = vector.shape_cast %5 : vector<1x2x16xf32> to vector<2x16xf32>
    %c0_i32 = arith.constant 0 : i32
    %7 = arith.muli %2, %c0_i32 : i32
    %8 = arith.addi %0, %7 : i32
    %c0_5 = arith.constant 0 : index
    %9 = arith.index_cast %8 : i32 to index
    %c0_6 = arith.constant 0 : index
    %c0_7 = arith.constant 0 : index
    %10 = vector.load %arg1[%c0_5, %9, %c0_6, %c0_7] : memref<1x8x2x64xf32, #tpu.memory_space<vmem>>, vector<1x1x2x64xf32>
    %11 = vector.shape_cast %10 : vector<1x1x2x64xf32> to vector<2x64xf32>
    %c0_8 = arith.constant 0 : index
    %c0_9 = arith.constant 0 : index
    %c0_10 = arith.constant 0 : index
    %12 = vector.load %arg2[%c0_8, %c0_9, %c0_10] : memref<1x16x64xf32, #tpu.memory_space<vmem>>, vector<1x16x64xf32>
    %13 = vector.shape_cast %12 : vector<1x16x64xf32> to vector<16x64xf32>
    %cst = arith.constant dense<0.000000e+00> : vector<2x64xf32>
    %14 = tpu.matmul %4, %13, %cst {dimension_numbers = #tpu.dot_dimension_numbers<[1], [0], [0], [1], [0, 0, 1, 1], [], []>} : vector<2x16xf32>, vector<16x64xf32>, vector<2x64xf32> -> vector<2x64xf32>
    %15 = arith.addf %11, %14 : vector<2x64xf32>
    %16 = arith.negf %15 : vector<2x64xf32>
    %17 = math.exp %16 : vector<2x64xf32>
    %cst_11 = arith.constant 1.000000e+00 : f32
    %18 = vector.broadcast %cst_11 : f32 to vector<2x64xf32>
    %19 = arith.addf %18, %17 : vector<2x64xf32>
    %20 = arith.divf %18, %19 : vector<2x64xf32>
    %21 = math.tanh %15 : vector<2x64xf32>
    %22 = vector.extract_strided_slice %20 {offsets = [0, 0], sizes = [2, 16], strides = [1, 1]} : vector<2x64xf32> to vector<2x16xf32>
    %23 = vector.extract_strided_slice %20 {offsets = [0, 16], sizes = [2, 16], strides = [1, 1]} : vector<2x64xf32> to vector<2x16xf32>
    %24 = vector.extract_strided_slice %21 {offsets = [0, 32], sizes = [2, 16], strides = [1, 1]} : vector<2x64xf32> to vector<2x16xf32>
    %25 = vector.extract_strided_slice %20 {offsets = [0, 48], sizes = [2, 16], strides = [1, 1]} : vector<2x64xf32> to vector<2x16xf32>
    %26 = arith.mulf %23, %6 : vector<2x16xf32>
    %27 = arith.mulf %22, %24 : vector<2x16xf32>
    %28 = arith.addf %26, %27 : vector<2x16xf32>
    %29 = math.tanh %28 : vector<2x16xf32>
    %30 = arith.mulf %25, %29 : vector<2x16xf32>
    %c0_12 = arith.constant 0 : index
    %31 = arith.index_cast %8 : i32 to index
    %c0_13 = arith.constant 0 : index
    %c0_14 = arith.constant 0 : index
    %32 = vector.load %arg5[%c0_12, %31, %c0_13, %c0_14] : memref<1x8x2x16xf32, #tpu.memory_space<vmem>>, vector<1x1x2x16xf32>
    %33 = vector.shape_cast %32 : vector<1x1x2x16xf32> to vector<2x16xf32>
    %34 = vector.shape_cast %30 : vector<2x16xf32> to vector<1x1x2x16xf32>
    tpu.vector_store %arg5[%c0_12, %31, %c0_13, %c0_14], %34 {strides = array<i32>} : memref<1x8x2x16xf32, #tpu.memory_space<vmem>>, vector<1x1x2x16xf32>,
    %c1_i32_15 = arith.constant 1 : i32
    %35 = arith.muli %2, %c1_i32_15 : i32
    %36 = arith.addi %0, %35 : i32
    %c0_16 = arith.constant 0 : index
    %37 = arith.index_cast %36 : i32 to index
    %c0_17 = arith.constant 0 : index
    %c0_18 = arith.constant 0 : index
    %38 = vector.load %arg1[%c0_16, %37, %c0_17, %c0_18] : memref<1x8x2x64xf32, #tpu.memory_space<vmem>>, vector<1x1x2x64xf32>
    %39 = vector.shape_cast %38 : vector<1x1x2x64xf32> to vector<2x64xf32>
    %c0_19 = arith.constant 0 : index
    %c0_20 = arith.constant 0 : index
    %c0_21 = arith.constant 0 : index
    %40 = vector.load %arg2[%c0_19, %c0_20, %c0_21] : memref<1x16x64xf32, #tpu.memory_space<vmem>>, vector<1x16x64xf32>
    %41 = vector.shape_cast %40 : vector<1x16x64xf32> to vector<16x64xf32>
    %cst_22 = arith.constant dense<0.000000e+00> : vector<2x64xf32>
    %42 = tpu.matmul %30, %41, %cst_22 {dimension_numbers = #tpu.dot_dimension_numbers<[1], [0], [0], [1], [0, 0, 1, 1], [], []>} : vector<2x16xf32>, vector<16x64xf32>, vector<2x64xf32> -> vector<2x64xf32>
    %43 = arith.addf %39, %42 : vector<2x64xf32>
    %44 = arith.negf %43 : vector<2x64xf32>
    %45 = math.exp %44 : vector<2x64xf32>
    %cst_23 = arith.constant 1.000000e+00 : f32
    %46 = vector.broadcast %cst_23 : f32 to vector<2x64xf32>
    %47 = arith.addf %46, %45 : vector<2x64xf32>
    %48 = arith.divf %46, %47 : vector<2x64xf32>
    %49 = math.tanh %43 : vector<2x64xf32>
    %50 = vector.extract_strided_slice %48 {offsets = [0, 0], sizes = [2, 16], strides = [1, 1]} : vector<2x64xf32> to vector<2x16xf32>
    %51 = vector.extract_strided_slice %48 {offsets = [0, 16], sizes = [2, 16], strides = [1, 1]} : vector<2x64xf32> to vector<2x16xf32>
    %52 = vector.extract_strided_slice %49 {offsets = [0, 32], sizes = [2, 16], strides = [1, 1]} : vector<2x64xf32> to vector<2x16xf32>
    %53 = vector.extract_strided_slice %48 {offsets = [0, 48], sizes = [2, 16], strides = [1, 1]} : vector<2x64xf32> to vector<2x16xf32>
    %54 = arith.mulf %51, %28 : vector<2x16xf32>
    %55 = arith.mulf %50, %52 : vector<2x16xf32>
    %56 = arith.addf %54, %55 : vector<2x16xf32>
    %57 = math.tanh %56 : vector<2x16xf32>
    %58 = arith.mulf %53, %57 : vector<2x16xf32>
    %c0_24 = arith.constant 0 : index
    %59 = arith.index_cast %36 : i32 to index
    %c0_25 = arith.constant 0 : index
    %c0_26 = arith.constant 0 : index
    %60 = vector.load %arg5[%c0_24, %59, %c0_25, %c0_26] : memref<1x8x2x16xf32, #tpu.memory_space<vmem>>, vector<1x1x2x16xf32>
    %61 = vector.shape_cast %60 : vector<1x1x2x16xf32> to vector<2x16xf32>
    %62 = vector.shape_cast %58 : vector<2x16xf32> to vector<1x1x2x16xf32>
    tpu.vector_store %arg5[%c0_24, %59, %c0_25, %c0_26], %62 {strides = array<i32>} : memref<1x8x2x16xf32, #tpu.memory_space<vmem>>, vector<1x1x2x16xf32>,
    %c2_i32_27 = arith.constant 2 : i32
    %63 = arith.muli %2, %c2_i32_27 : i32
    %64 = arith.addi %0, %63 : i32
    %c0_28 = arith.constant 0 : index
    %65 = arith.index_cast %64 : i32 to index
    %c0_29 = arith.constant 0 : index
    %c0_30 = arith.constant 0 : index
    %66 = vector.load %arg1[%c0_28, %65, %c0_29, %c0_30] : memref<1x8x2x64xf32, #tpu.memory_space<vmem>>, vector<1x1x2x64xf32>
    %67 = vector.shape_cast %66 : vector<1x1x2x64xf32> to vector<2x64xf32>
    %c0_31 = arith.constant 0 : index
    %c0_32 = arith.constant 0 : index
    %c0_33 = arith.constant 0 : index
    %68 = vector.load %arg2[%c0_31, %c0_32, %c0_33] : memref<1x16x64xf32, #tpu.memory_space<vmem>>, vector<1x16x64xf32>
    %69 = vector.shape_cast %68 : vector<1x16x64xf32> to vector<16x64xf32>
    %cst_34 = arith.constant dense<0.000000e+00> : vector<2x64xf32>
    %70 = tpu.matmul %58, %69, %cst_34 {dimension_numbers = #tpu.dot_dimension_numbers<[1], [0], [0], [1], [0, 0, 1, 1], [], []>} : vector<2x16xf32>, vector<16x64xf32>, vector<2x64xf32> -> vector<2x64xf32>
    %71 = arith.addf %67, %70 : vector<2x64xf32>
    %72 = arith.negf %71 : vector<2x64xf32>
    %73 = math.exp %72 : vector<2x64xf32>
    %cst_35 = arith.constant 1.000000e+00 : f32
    %74 = vector.broadcast %cst_35 : f32 to vector<2x64xf32>
    %75 = arith.addf %74, %73 : vector<2x64xf32>
    %76 = arith.divf %74, %75 : vector<2x64xf32>
    %77 = math.tanh %71 : vector<2x64xf32>
    %78 = vector.extract_strided_slice %76 {offsets = [0, 0], sizes = [2, 16], strides = [1, 1]} : vector<2x64xf32> to vector<2x16xf32>
    %79 = vector.extract_strided_slice %76 {offsets = [0, 16], sizes = [2, 16], strides = [1, 1]} : vector<2x64xf32> to vector<2x16xf32>
    %80 = vector.extract_strided_slice %77 {offsets = [0, 32], sizes = [2, 16], strides = [1, 1]} : vector<2x64xf32> to vector<2x16xf32>
    %81 = vector.extract_strided_slice %76 {offsets = [0, 48], sizes = [2, 16], strides = [1, 1]} : vector<2x64xf32> to vector<2x16xf32>
    %82 = arith.mulf %79, %56 : vector<2x16xf32>
    %83 = arith.mulf %78, %80 : vector<2x16xf32>
    %84 = arith.addf %82, %83 : vector<2x16xf32>
    %85 = math.tanh %84 : vector<2x16xf32>
    %86 = arith.mulf %81, %85 : vector<2x16xf32>
    %c0_36 = arith.constant 0 : index
    %87 = arith.index_cast %64 : i32 to index
    %c0_37 = arith.constant 0 : index
    %c0_38 = arith.constant 0 : index
    %88 = vector.load %arg5[%c0_36, %87, %c0_37, %c0_38] : memref<1x8x2x16xf32, #tpu.memory_space<vmem>>, vector<1x1x2x16xf32>
    %89 = vector.shape_cast %88 : vector<1x1x2x16xf32> to vector<2x16xf32>
    %90 = vector.shape_cast %86 : vector<2x16xf32> to vector<1x1x2x16xf32>
    tpu.vector_store %arg5[%c0_36, %87, %c0_37, %c0_38], %90 {strides = array<i32>} : memref<1x8x2x16xf32, #tpu.memory_space<vmem>>, vector<1x1x2x16xf32>,
    %c3_i32 = arith.constant 3 : i32
    %91 = arith.muli %2, %c3_i32 : i32
    %92 = arith.addi %0, %91 : i32
    %c0_39 = arith.constant 0 : index
    %93 = arith.index_cast %92 : i32 to index
    %c0_40 = arith.constant 0 : index
    %c0_41 = arith.constant 0 : index
    %94 = vector.load %arg1[%c0_39, %93, %c0_40, %c0_41] : memref<1x8x2x64xf32, #tpu.memory_space<vmem>>, vector<1x1x2x64xf32>
    %95 = vector.shape_cast %94 : vector<1x1x2x64xf32> to vector<2x64xf32>
    %c0_42 = arith.constant 0 : index
    %c0_43 = arith.constant 0 : index
    %c0_44 = arith.constant 0 : index
    %96 = vector.load %arg2[%c0_42, %c0_43, %c0_44] : memref<1x16x64xf32, #tpu.memory_space<vmem>>, vector<1x16x64xf32>
    %97 = vector.shape_cast %96 : vector<1x16x64xf32> to vector<16x64xf32>
    %cst_45 = arith.constant dense<0.000000e+00> : vector<2x64xf32>
    %98 = tpu.matmul %86, %97, %cst_45 {dimension_numbers = #tpu.dot_dimension_numbers<[1], [0], [0], [1], [0, 0, 1, 1], [], []>} : vector<2x16xf32>, vector<16x64xf32>, vector<2x64xf32> -> vector<2x64xf32>
    %99 = arith.addf %95, %98 : vector<2x64xf32>
    %100 = arith.negf %99 : vector<2x64xf32>
    %101 = math.exp %100 : vector<2x64xf32>
    %cst_46 = arith.constant 1.000000e+00 : f32
    %102 = vector.broadcast %cst_46 : f32 to vector<2x64xf32>
    %103 = arith.addf %102, %101 : vector<2x64xf32>
    %104 = arith.divf %102, %103 : vector<2x64xf32>
    %105 = math.tanh %99 : vector<2x64xf32>
    %106 = vector.extract_strided_slice %104 {offsets = [0, 0], sizes = [2, 16], strides = [1, 1]} : vector<2x64xf32> to vector<2x16xf32>
    %107 = vector.extract_strided_slice %104 {offsets = [0, 16], sizes = [2, 16], strides = [1, 1]} : vector<2x64xf32> to vector<2x16xf32>
    %108 = vector.extract_strided_slice %105 {offsets = [0, 32], sizes = [2, 16], strides = [1, 1]} : vector<2x64xf32> to vector<2x16xf32>
    %109 = vector.extract_strided_slice %104 {offsets = [0, 48], sizes = [2, 16], strides = [1, 1]} : vector<2x64xf32> to vector<2x16xf32>
    %110 = arith.mulf %107, %84 : vector<2x16xf32>
    %111 = arith.mulf %106, %108 : vector<2x16xf32>
    %112 = arith.addf %110, %111 : vector<2x16xf32>
    %113 = math.tanh %112 : vector<2x16xf32>
    %114 = arith.mulf %109, %113 : vector<2x16xf32>
    %c0_47 = arith.constant 0 : index
    %115 = arith.index_cast %92 : i32 to index
    %c0_48 = arith.constant 0 : index
    %c0_49 = arith.constant 0 : index
    %116 = vector.load %arg5[%c0_47, %115, %c0_48, %c0_49] : memref<1x8x2x16xf32, #tpu.memory_space<vmem>>, vector<1x1x2x16xf32>
    %117 = vector.shape_cast %116 : vector<1x1x2x16xf32> to vector<2x16xf32>
    %118 = vector.shape_cast %114 : vector<2x16xf32> to vector<1x1x2x16xf32>
    tpu.vector_store %arg5[%c0_47, %115, %c0_48, %c0_49], %118 {strides = array<i32>} : memref<1x8x2x16xf32, #tpu.memory_space<vmem>>, vector<1x1x2x16xf32>,
    %c4_i32 = arith.constant 4 : i32
    %119 = arith.muli %2, %c4_i32 : i32
    %120 = arith.addi %0, %119 : i32
    %c0_50 = arith.constant 0 : index
    %121 = arith.index_cast %120 : i32 to index
    %c0_51 = arith.constant 0 : index
    %c0_52 = arith.constant 0 : index
    %122 = vector.load %arg1[%c0_50, %121, %c0_51, %c0_52] : memref<1x8x2x64xf32, #tpu.memory_space<vmem>>, vector<1x1x2x64xf32>
    %123 = vector.shape_cast %122 : vector<1x1x2x64xf32> to vector<2x64xf32>
    %c0_53 = arith.constant 0 : index
    %c0_54 = arith.constant 0 : index
    %c0_55 = arith.constant 0 : index
    %124 = vector.load %arg2[%c0_53, %c0_54, %c0_55] : memref<1x16x64xf32, #tpu.memory_space<vmem>>, vector<1x16x64xf32>
    %125 = vector.shape_cast %124 : vector<1x16x64xf32> to vector<16x64xf32>
    %cst_56 = arith.constant dense<0.000000e+00> : vector<2x64xf32>
    %126 = tpu.matmul %114, %125, %cst_56 {dimension_numbers = #tpu.dot_dimension_numbers<[1], [0], [0], [1], [0, 0, 1, 1], [], []>} : vector<2x16xf32>, vector<16x64xf32>, vector<2x64xf32> -> vector<2x64xf32>
    %127 = arith.addf %123, %126 : vector<2x64xf32>
    %128 = arith.negf %127 : vector<2x64xf32>
    %129 = math.exp %128 : vector<2x64xf32>
    %cst_57 = arith.constant 1.000000e+00 : f32
    %130 = vector.broadcast %cst_57 : f32 to vector<2x64xf32>
    %131 = arith.addf %130, %129 : vector<2x64xf32>
    %132 = arith.divf %130, %131 : vector<2x64xf32>
    %133 = math.tanh %127 : vector<2x64xf32>
    %134 = vector.extract_strided_slice %132 {offsets = [0, 0], sizes = [2, 16], strides = [1, 1]} : vector<2x64xf32> to vector<2x16xf32>
    %135 = vector.extract_strided_slice %132 {offsets = [0, 16], sizes = [2, 16], strides = [1, 1]} : vector<2x64xf32> to vector<2x16xf32>
    %136 = vector.extract_strided_slice %133 {offsets = [0, 32], sizes = [2, 16], strides = [1, 1]} : vector<2x64xf32> to vector<2x16xf32>
    %137 = vector.extract_strided_slice %132 {offsets = [0, 48], sizes = [2, 16], strides = [1, 1]} : vector<2x64xf32> to vector<2x16xf32>
    %138 = arith.mulf %135, %112 : vector<2x16xf32>
    %139 = arith.mulf %134, %136 : vector<2x16xf32>
    %140 = arith.addf %138, %139 : vector<2x16xf32>
    %141 = math.tanh %140 : vector<2x16xf32>
    %142 = arith.mulf %137, %141 : vector<2x16xf32>
    %c0_58 = arith.constant 0 : index
    %143 = arith.index_cast %120 : i32 to index
    %c0_59 = arith.constant 0 : index
    %c0_60 = arith.constant 0 : index
    %144 = vector.load %arg5[%c0_58, %143, %c0_59, %c0_60] : memref<1x8x2x16xf32, #tpu.memory_space<vmem>>, vector<1x1x2x16xf32>
    %145 = vector.shape_cast %144 : vector<1x1x2x16xf32> to vector<2x16xf32>
    %146 = vector.shape_cast %142 : vector<2x16xf32> to vector<1x1x2x16xf32>
    tpu.vector_store %arg5[%c0_58, %143, %c0_59, %c0_60], %146 {strides = array<i32>} : memref<1x8x2x16xf32, #tpu.memory_space<vmem>>, vector<1x1x2x16xf32>,
    %c5_i32 = arith.constant 5 : i32
    %147 = arith.muli %2, %c5_i32 : i32
    %148 = arith.addi %0, %147 : i32
    %c0_61 = arith.constant 0 : index
    %149 = arith.index_cast %148 : i32 to index
    %c0_62 = arith.constant 0 : index
    %c0_63 = arith.constant 0 : index
    %150 = vector.load %arg1[%c0_61, %149, %c0_62, %c0_63] : memref<1x8x2x64xf32, #tpu.memory_space<vmem>>, vector<1x1x2x64xf32>
    %151 = vector.shape_cast %150 : vector<1x1x2x64xf32> to vector<2x64xf32>
    %c0_64 = arith.constant 0 : index
    %c0_65 = arith.constant 0 : index
    %c0_66 = arith.constant 0 : index
    %152 = vector.load %arg2[%c0_64, %c0_65, %c0_66] : memref<1x16x64xf32, #tpu.memory_space<vmem>>, vector<1x16x64xf32>
    %153 = vector.shape_cast %152 : vector<1x16x64xf32> to vector<16x64xf32>
    %cst_67 = arith.constant dense<0.000000e+00> : vector<2x64xf32>
    %154 = tpu.matmul %142, %153, %cst_67 {dimension_numbers = #tpu.dot_dimension_numbers<[1], [0], [0], [1], [0, 0, 1, 1], [], []>} : vector<2x16xf32>, vector<16x64xf32>, vector<2x64xf32> -> vector<2x64xf32>
    %155 = arith.addf %151, %154 : vector<2x64xf32>
    %156 = arith.negf %155 : vector<2x64xf32>
    %157 = math.exp %156 : vector<2x64xf32>
    %cst_68 = arith.constant 1.000000e+00 : f32
    %158 = vector.broadcast %cst_68 : f32 to vector<2x64xf32>
    %159 = arith.addf %158, %157 : vector<2x64xf32>
    %160 = arith.divf %158, %159 : vector<2x64xf32>
    %161 = math.tanh %155 : vector<2x64xf32>
    %162 = vector.extract_strided_slice %160 {offsets = [0, 0], sizes = [2, 16], strides = [1, 1]} : vector<2x64xf32> to vector<2x16xf32>
    %163 = vector.extract_strided_slice %160 {offsets = [0, 16], sizes = [2, 16], strides = [1, 1]} : vector<2x64xf32> to vector<2x16xf32>
    %164 = vector.extract_strided_slice %161 {offsets = [0, 32], sizes = [2, 16], strides = [1, 1]} : vector<2x64xf32> to vector<2x16xf32>
    %165 = vector.extract_strided_slice %160 {offsets = [0, 48], sizes = [2, 16], strides = [1, 1]} : vector<2x64xf32> to vector<2x16xf32>
    %166 = arith.mulf %163, %140 : vector<2x16xf32>
    %167 = arith.mulf %162, %164 : vector<2x16xf32>
    %168 = arith.addf %166, %167 : vector<2x16xf32>
    %169 = math.tanh %168 : vector<2x16xf32>
    %170 = arith.mulf %165, %169 : vector<2x16xf32>
    %c0_69 = arith.constant 0 : index
    %171 = arith.index_cast %148 : i32 to index
    %c0_70 = arith.constant 0 : index
    %c0_71 = arith.constant 0 : index
    %172 = vector.load %arg5[%c0_69, %171, %c0_70, %c0_71] : memref<1x8x2x16xf32, #tpu.memory_space<vmem>>, vector<1x1x2x16xf32>
    %173 = vector.shape_cast %172 : vector<1x1x2x16xf32> to vector<2x16xf32>
    %174 = vector.shape_cast %170 : vector<2x16xf32> to vector<1x1x2x16xf32>
    tpu.vector_store %arg5[%c0_69, %171, %c0_70, %c0_71], %174 {strides = array<i32>} : memref<1x8x2x16xf32, #tpu.memory_space<vmem>>, vector<1x1x2x16xf32>,
    %c6_i32 = arith.constant 6 : i32
    %175 = arith.muli %2, %c6_i32 : i32
    %176 = arith.addi %0, %175 : i32
    %c0_72 = arith.constant 0 : index
    %177 = arith.index_cast %176 : i32 to index
    %c0_73 = arith.constant 0 : index
    %c0_74 = arith.constant 0 : index
    %178 = vector.load %arg1[%c0_72, %177, %c0_73, %c0_74] : memref<1x8x2x64xf32, #tpu.memory_space<vmem>>, vector<1x1x2x64xf32>
    %179 = vector.shape_cast %178 : vector<1x1x2x64xf32> to vector<2x64xf32>
    %c0_75 = arith.constant 0 : index
    %c0_76 = arith.constant 0 : index
    %c0_77 = arith.constant 0 : index
    %180 = vector.load %arg2[%c0_75, %c0_76, %c0_77] : memref<1x16x64xf32, #tpu.memory_space<vmem>>, vector<1x16x64xf32>
    %181 = vector.shape_cast %180 : vector<1x16x64xf32> to vector<16x64xf32>
    %cst_78 = arith.constant dense<0.000000e+00> : vector<2x64xf32>
    %182 = tpu.matmul %170, %181, %cst_78 {dimension_numbers = #tpu.dot_dimension_numbers<[1], [0], [0], [1], [0, 0, 1, 1], [], []>} : vector<2x16xf32>, vector<16x64xf32>, vector<2x64xf32> -> vector<2x64xf32>
    %183 = arith.addf %179, %182 : vector<2x64xf32>
    %184 = arith.negf %183 : vector<2x64xf32>
    %185 = math.exp %184 : vector<2x64xf32>
    %cst_79 = arith.constant 1.000000e+00 : f32
    %186 = vector.broadcast %cst_79 : f32 to vector<2x64xf32>
    %187 = arith.addf %186, %185 : vector<2x64xf32>
    %188 = arith.divf %186, %187 : vector<2x64xf32>
    %189 = math.tanh %183 : vector<2x64xf32>
    %190 = vector.extract_strided_slice %188 {offsets = [0, 0], sizes = [2, 16], strides = [1, 1]} : vector<2x64xf32> to vector<2x16xf32>
    %191 = vector.extract_strided_slice %188 {offsets = [0, 16], sizes = [2, 16], strides = [1, 1]} : vector<2x64xf32> to vector<2x16xf32>
    %192 = vector.extract_strided_slice %189 {offsets = [0, 32], sizes = [2, 16], strides = [1, 1]} : vector<2x64xf32> to vector<2x16xf32>
    %193 = vector.extract_strided_slice %188 {offsets = [0, 48], sizes = [2, 16], strides = [1, 1]} : vector<2x64xf32> to vector<2x16xf32>
    %194 = arith.mulf %191, %168 : vector<2x16xf32>
    %195 = arith.mulf %190, %192 : vector<2x16xf32>
    %196 = arith.addf %194, %195 : vector<2x16xf32>
    %197 = math.tanh %196 : vector<2x16xf32>
    %198 = arith.mulf %193, %197 : vector<2x16xf32>
    %c0_80 = arith.constant 0 : index
    %199 = arith.index_cast %176 : i32 to index
    %c0_81 = arith.constant 0 : index
    %c0_82 = arith.constant 0 : index
    %200 = vector.load %arg5[%c0_80, %199, %c0_81, %c0_82] : memref<1x8x2x16xf32, #tpu.memory_space<vmem>>, vector<1x1x2x16xf32>
    %201 = vector.shape_cast %200 : vector<1x1x2x16xf32> to vector<2x16xf32>
    %202 = vector.shape_cast %198 : vector<2x16xf32> to vector<1x1x2x16xf32>
    tpu.vector_store %arg5[%c0_80, %199, %c0_81, %c0_82], %202 {strides = array<i32>} : memref<1x8x2x16xf32, #tpu.memory_space<vmem>>, vector<1x1x2x16xf32>,
    %c7_i32_83 = arith.constant 7 : i32
    %203 = arith.muli %2, %c7_i32_83 : i32
    %204 = arith.addi %0, %203 : i32
    %c0_84 = arith.constant 0 : index
    %205 = arith.index_cast %204 : i32 to index
    %c0_85 = arith.constant 0 : index
    %c0_86 = arith.constant 0 : index
    %206 = vector.load %arg1[%c0_84, %205, %c0_85, %c0_86] : memref<1x8x2x64xf32, #tpu.memory_space<vmem>>, vector<1x1x2x64xf32>
    %207 = vector.shape_cast %206 : vector<1x1x2x64xf32> to vector<2x64xf32>
    %c0_87 = arith.constant 0 : index
    %c0_88 = arith.constant 0 : index
    %c0_89 = arith.constant 0 : index
    %208 = vector.load %arg2[%c0_87, %c0_88, %c0_89] : memref<1x16x64xf32, #tpu.memory_space<vmem>>, vector<1x16x64xf32>
    %209 = vector.shape_cast %208 : vector<1x16x64xf32> to vector<16x64xf32>
    %cst_90 = arith.constant dense<0.000000e+00> : vector<2x64xf32>
    %210 = tpu.matmul %198, %209, %cst_90 {dimension_numbers = #tpu.dot_dimension_numbers<[1], [0], [0], [1], [0, 0, 1, 1], [], []>} : vector<2x16xf32>, vector<16x64xf32>, vector<2x64xf32> -> vector<2x64xf32>
    %211 = arith.addf %207, %210 : vector<2x64xf32>
    %212 = arith.negf %211 : vector<2x64xf32>
    %213 = math.exp %212 : vector<2x64xf32>
    %cst_91 = arith.constant 1.000000e+00 : f32
    %214 = vector.broadcast %cst_91 : f32 to vector<2x64xf32>
    %215 = arith.addf %214, %213 : vector<2x64xf32>
    %216 = arith.divf %214, %215 : vector<2x64xf32>
    %217 = math.tanh %211 : vector<2x64xf32>
    %218 = vector.extract_strided_slice %216 {offsets = [0, 0], sizes = [2, 16], strides = [1, 1]} : vector<2x64xf32> to vector<2x16xf32>
    %219 = vector.extract_strided_slice %216 {offsets = [0, 16], sizes = [2, 16], strides = [1, 1]} : vector<2x64xf32> to vector<2x16xf32>
    %220 = vector.extract_strided_slice %217 {offsets = [0, 32], sizes = [2, 16], strides = [1, 1]} : vector<2x64xf32> to vector<2x16xf32>
    %221 = vector.extract_strided_slice %216 {offsets = [0, 48], sizes = [2, 16], strides = [1, 1]} : vector<2x64xf32> to vector<2x16xf32>
    %222 = arith.mulf %219, %196 : vector<2x16xf32>
    %223 = arith.mulf %218, %220 : vector<2x16xf32>
    %224 = arith.addf %222, %223 : vector<2x16xf32>
    %225 = math.tanh %224 : vector<2x16xf32>
    %226 = arith.mulf %221, %225 : vector<2x16xf32>
    %c0_92 = arith.constant 0 : index
    %227 = arith.index_cast %204 : i32 to index
    %c0_93 = arith.constant 0 : index
    %c0_94 = arith.constant 0 : index
    %228 = vector.load %arg5[%c0_92, %227, %c0_93, %c0_94] : memref<1x8x2x16xf32, #tpu.memory_space<vmem>>, vector<1x1x2x16xf32>
    %229 = vector.shape_cast %228 : vector<1x1x2x16xf32> to vector<2x16xf32>
    %230 = vector.shape_cast %226 : vector<2x16xf32> to vector<1x1x2x16xf32>
    tpu.vector_store %arg5[%c0_92, %227, %c0_93, %c0_94], %230 {strides = array<i32>} : memref<1x8x2x16xf32, #tpu.memory_space<vmem>>, vector<1x1x2x16xf32>,
    %c8_i32 = arith.constant 8 : i32
    %c0_95 = arith.constant 0 : index
    %c0_96 = arith.constant 0 : index
    %c0_97 = arith.constant 0 : index
    %231 = vector.load %arg6[%c0_95, %c0_96, %c0_97] : memref<1x2x16xf32, #tpu.memory_space<vmem>>, vector<1x2x16xf32>
    %232 = vector.shape_cast %231 : vector<1x2x16xf32> to vector<2x16xf32>
    %233 = vector.shape_cast %226 : vector<2x16xf32> to vector<1x2x16xf32>
    tpu.vector_store %arg6[%c0_95, %c0_96, %c0_97], %233 {strides = array<i32>} : memref<1x2x16xf32, #tpu.memory_space<vmem>>, vector<1x2x16xf32>,
    %c0_98 = arith.constant 0 : index
    %c0_99 = arith.constant 0 : index
    %c0_100 = arith.constant 0 : index
    %234 = vector.load %arg7[%c0_98, %c0_99, %c0_100] : memref<1x2x16xf32, #tpu.memory_space<vmem>>, vector<1x2x16xf32>
    %235 = vector.shape_cast %234 : vector<1x2x16xf32> to vector<2x16xf32>
    %236 = vector.shape_cast %224 : vector<2x16xf32> to vector<1x2x16xf32>
    tpu.vector_store %arg7[%c0_98, %c0_99, %c0_100], %236 {strides = array<i32>} : memref<1x2x16xf32, #tpu.memory_space<vmem>>, vector<1x2x16xf32>,
    return
  }
  func.func @transform_0(%arg0: i32) -> (i32, i32, i32, i32) {
    %c0_i32 = arith.constant 0 : i32
    %c0_i32_0 = arith.constant 0 : i32
    %c0_i32_1 = arith.constant 0 : i32
    %c0_i32_2 = arith.constant 0 : i32
    return %arg0, %c0_i32, %c0_i32_0, %c0_i32_1 : i32, i32, i32, i32
  }
  func.func @transform_1(%arg0: i32) -> (i32, i32, i32) {
    %c0_i32 = arith.constant 0 : i32
    %c0_i32_0 = arith.constant 0 : i32
    %c0_i32_1 = arith.constant 0 : i32
    return %arg0, %c0_i32, %c0_i32_0 : i32, i32, i32
  }
  func.func @transform_2(%arg0: i32) -> (i32, i32, i32) {
    %c0_i32 = arith.constant 0 : i32
    %c0_i32_0 = arith.constant 0 : i32
    %c0_i32_1 = arith.constant 0 : i32
    return %arg0, %c0_i32, %c0_i32_0 : i32, i32, i32
  }
  func.func @transform_3(%arg0: i32) -> (i32, i32, i32) {
    %c0_i32 = arith.constant 0 : i32
    %c0_i32_0 = arith.constant 0 : i32
    %c0_i32_1 = arith.constant 0 : i32
    return %arg0, %c0_i32, %c0_i32_0 : i32, i32, i32
  }
  func.func @transform_4(%arg0: i32) -> (i32, i32, i32, i32) {
    %c0_i32 = arith.constant 0 : i32
    %c0_i32_0 = arith.constant 0 : i32
    %c0_i32_1 = arith.constant 0 : i32
    %c0_i32_2 = arith.constant 0 : i32
    return %arg0, %c0_i32, %c0_i32_0, %c0_i32_1 : i32, i32, i32, i32
  }
  func.func @transform_5(%arg0: i32) -> (i32, i32, i32) {
    %c0_i32 = arith.constant 0 : i32
    %c0_i32_0 = arith.constant 0 : i32
    %c0_i32_1 = arith.constant 0 : i32
    return %arg0, %c0_i32, %c0_i32_0 : i32, i32, i32
  }
  func.func @transform_6(%arg0: i32) -> (i32, i32, i32) {
    %c0_i32 = arith.constant 0 : i32
    %c0_i32_0 = arith.constant 0 : i32
    %c0_i32_1 = arith.constant 0 : i32
    return %arg0, %c0_i32, %c0_i32_0 : i32, i32, i32
  }
}

</mosaic_0001>

<llo_original>
// kernel: tpu_custom_call.1
$region0: #{tpu_custom_call.1}
  #allocation0 [shape = 'u32[]', space=smem, size = 0x4, offset = 0x4, fixed_abs, tag = 'smem constant byte address 0x4 - core index']
  #allocation1 [shape = 'u32[72,128]{1,0:T(1,128)}', space=vmem, size = 0x9000, scoped, tag = 'internal scratch']
  %s0 = inlined_call_operand.hbm [shape: f32[2,8,2,64], index: 0, kind: input, shape index: {}]
  %s1 = inlined_call_operand.hbm [shape: f32[2,16,64], index: 1, kind: input, shape index: {}]
  %s2 = inlined_call_operand.hbm [shape: f32[2,2,16], index: 2, kind: input, shape index: {}]
  %s3 = inlined_call_operand.hbm [shape: f32[2,2,16], index: 3, kind: input, shape index: {}]
  %s4 = inlined_call_operand.hbm [shape: f32[2,8,2,16], index: 4, kind: output, shape index: {0}]
  %s5 = inlined_call_operand.hbm [shape: f32[2,2,16], index: 5, kind: output, shape index: {1}]
  %s6 = inlined_call_operand.hbm [shape: f32[2,2,16], index: 6, kind: output, shape index: {2}]
  %7 = xla_tuple %s4, %s5, %s6
  %s8 = sld [smem:[#allocation0]]
  $region81: #{tpu_custom_call.1} parent=0
    _
  %s10 = ssub.s32 1, %s8
  %s11 = scalar_select 0, %s10, %s8
  $region1: #{tpu_custom_call.1} parent=0
    #allocation2 [shape = 'u8[16384]{0}', space=vmem, size = 0x4000, scoped, tag = 'input window, operand 0']
    #allocation3 [shape = 's32[2]{0}', space=sflag, size = 0x8, scoped, tag = 'scoped memory for tpu_custom_call.1']
    #allocation4 [shape = 's32[2]{0}', space=sflag, size = 0x8, scoped, tag = 'scoped memory for tpu_custom_call.1']
    #allocation5 [shape = 'u8[16384]{0}', space=vmem, size = 0x4000, scoped, tag = 'input window, operand 1']
    #allocation6 [shape = 's32[2]{0}', space=sflag, size = 0x8, scoped, tag = 'scoped memory for tpu_custom_call.1']
    #allocation7 [shape = 'u8[2048]{0}', space=vmem, size = 0x800, scoped, tag = 'input window, operand 2']
    #allocation8 [shape = 'u8[2048]{0}', space=vmem, size = 0x800, scoped, tag = 'input window, operand 3']
    #allocation9 [shape = 's32[2]{0}', space=sflag, size = 0x8, scoped, tag = 'scoped memory for tpu_custom_call.1']
    #allocation10 [shape = 'u8[16384]{0}', space=vmem, size = 0x4000, scoped, tag = 'output window, operand 0']
    #allocation11 [shape = 'u8[2048]{0}', space=vmem, size = 0x800, scoped, tag = 'output window, operand 1']
    #allocation12 [shape = 's32[2]{0}', space=sflag, size = 0x8, scoped, tag = 'scoped memory for tpu_custom_call.1']
    #allocation13 [shape = 'u8[2048]{0}', space=vmem, size = 0x800, scoped, tag = 'output window, operand 2']
    %12 = vsyncpa [#allocation3], 0
    %s13 = scalar_lea.sflag [#allocation3], 1
    %14 = vsyncpa %s13, 0
    %15 = vsyncpa [#allocation6], 0
    %s16 = scalar_lea.sflag [#allocation6], 1
    %17 = vsyncpa %s16, 0
    %18 = vsyncpa [#allocation9], 0
    %s19 = scalar_lea.sflag [#allocation9], 1
    %20 = vsyncpa %s19, 0
    %21 = vsyncpa [#allocation4], 0
    %s22 = scalar_lea.sflag [#allocation4], 1
    %23 = vsyncpa %s22, 0
    %24 = vsyncpa [#allocation12], 0
    %s25 = scalar_lea.sflag [#allocation12], 1
    %26 = vsyncpa %s25, 0
    loop: start=0, step=1, limit=4
    $region2: #{tpu_custom_call.1} parent=1 // loop_pre_header
      _
    $region3: #{tpu_custom_call.1} parent=1 // loop_header
      %s28 = sphi 0, %s32
      %p29 = scmp.ge.s32.totalorder %s28, 4
      %s38 = sphi 0, %s40
      %s41 = sphi 0, %s38
      %s42 = sphi 0, %s41
      %s58 = sphi 0, %s42
      %s64 = sphi 0, %s66
      %s67 = sphi 0, %s64
      %s68 = sphi 0, %s67
      %s84 = sphi 0, %s68
      %s90 = sphi 0, %s92
      %s93 = sphi 0, %s90
      %s94 = sphi 0, %s93
      %s110 = sphi 0, %s94
      %s116 = sphi 0, %s118
      %s119 = sphi 0, %s116
      %s120 = sphi 0, %s119
      %s136 = sphi 0, %s120
      %s142 = sphi 0, %s144
      %s145 = sphi 0, %s142
      %s146 = sphi 0, %s145
      %s162 = sphi 0, %s146
      %s168 = sphi 0, %s170
      %s171 = sphi 0, %s168
      %s172 = sphi 0, %s171
      %s188 = sphi 0, %s172
      %s194 = sphi 0, %s196
      %s197 = sphi 0, %s194
      %s198 = sphi 0, %s197
      %s214 = sphi 0, %s198
    $region4: #{tpu_custom_call.1} parent=1 // loop_header_branch
      %31 = sbr.rel (%p29) target = $region8
    $region5: #{tpu_custom_call.1} parent=1 // loop_body
      %s33 = ssub.s32 %s28, 1
      %s34 = ssub.s32 %s28, 2
      %s35 = sadd.s32 %s28, 1
      %s36 = ssub.s32 %s28, %s35
      %p37 = scmp.eq.s32.totalorder %s36, 0
      %s39 = sadd.s32 %s38, 1
      %s40 = scalar_select %p37, %s38, %s39
      %p43 = pneg %p37
      %p44 = scmp.eq.s32.totalorder %s28, 1
      %p45 = por %p43, %p44
      %p46 = scmp.ne.s32.totalorder %s38, %s41
      %p47 = scmp.eq.s32.totalorder %s28, 0
      %p48 = por %p46, %p47
      %p49 = scmp.ne.s32.totalorder %s38, %s41
      %p50 = scmp.eq.s32.totalorder %s33, 1
      %p51 = por %p49, %p50
      %p52 = scmp.ne.s32.totalorder %s41, %s42
      %p53 = scmp.eq.s32.totalorder %s33, 0
      %p54 = por %p52, %p53
      %p55 = scmp.ne.s32.totalorder %s41, %s42
      %p56 = scmp.eq.s32.totalorder %s34, 1
      %p57 = por %p55, %p56
      %p59 = scmp.ne.s32.totalorder %s42, %s58
      %p60 = scmp.eq.s32.totalorder %s34, 0
      %p61 = por %p59, %p60
      %s62 = ssub.s32 %s28, %s35
      %p63 = scmp.eq.s32.totalorder %s62, 0
      %s65 = sadd.s32 %s64, 1
      %s66 = scalar_select %p63, %s64, %s65
      %p69 = pneg %p63
      %p70 = scmp.eq.s32.totalorder %s28, 1
      %p71 = por %p69, %p70
      %p72 = scmp.ne.s32.totalorder %s64, %s67
      %p73 = scmp.eq.s32.totalorder %s28, 0
      %p74 = por %p72, %p73
      %p75 = scmp.ne.s32.totalorder %s64, %s67
      %p76 = scmp.eq.s32.totalorder %s33, 1
      %p77 = por %p75, %p76
      %p78 = scmp.ne.s32.totalorder %s67, %s68
      %p79 = scmp.eq.s32.totalorder %s33, 0
      %p80 = por %p78, %p79
      %p81 = scmp.ne.s32.totalorder %s67, %s68
      %p82 = scmp.eq.s32.totalorder %s34, 1
      %p83 = por %p81, %p82
      %p85 = scmp.ne.s32.totalorder %s68, %s84
      %p86 = scmp.eq.s32.totalorder %s34, 0
      %p87 = por %p85, %p86
      %s88 = ssub.s32 %s28, %s35
      %p89 = scmp.eq.s32.totalorder %s88, 0
      %s91 = sadd.s32 %s90, 1
      %s92 = scalar_select %p89, %s90, %s91
      %p95 = pneg %p89
      %p96 = scmp.eq.s32.totalorder %s28, 1
      %p97 = por %p95, %p96
      %p98 = scmp.ne.s32.totalorder %s90, %s93
      %p99 = scmp.eq.s32.totalorder %s28, 0
      %p100 = por %p98, %p99
      %p101 = scmp.ne.s32.totalorder %s90, %s93
      %p102 = scmp.eq.s32.totalorder %s33, 1
      %p103 = por %p101, %p102
      %p104 = scmp.ne.s32.totalorder %s93, %s94
      %p105 = scmp.eq.s32.totalorder %s33, 0
      %p106 = por %p104, %p105
      %p107 = scmp.ne.s32.totalorder %s93, %s94
      %p108 = scmp.eq.s32.totalorder %s34, 1
      %p109 = por %p107, %p108
      %p111 = scmp.ne.s32.totalorder %s94, %s110
      %p112 = scmp.eq.s32.totalorder %s34, 0
      %p113 = por %p111, %p112
      %s114 = ssub.s32 %s28, %s35
      %p115 = scmp.eq.s32.totalorder %s114, 0
      %s117 = sadd.s32 %s116, 1
      %s118 = scalar_select %p115, %s116, %s117
      %p121 = pneg %p115
      %p122 = scmp.eq.s32.totalorder %s28, 1
      %p123 = por %p121, %p122
      %p124 = scmp.ne.s32.totalorder %s116, %s119
      %p125 = scmp.eq.s32.totalorder %s28, 0
      %p126 = por %p124, %p125
      %p127 = scmp.ne.s32.totalorder %s116, %s119
      %p128 = scmp.eq.s32.totalorder %s33, 1
      %p129 = por %p127, %p128
      %p130 = scmp.ne.s32.totalorder %s119, %s120
      %p131 = scmp.eq.s32.totalorder %s33, 0
      %p132 = por %p130, %p131
      %p133 = scmp.ne.s32.totalorder %s119, %s120
      %p134 = scmp.eq.s32.totalorder %s34, 1
      %p135 = por %p133, %p134
      %p137 = scmp.ne.s32.totalorder %s120, %s136
      %p138 = scmp.eq.s32.totalorder %s34, 0
      %p139 = por %p137, %p138
      %s140 = ssub.s32 %s28, %s35
      %p141 = scmp.eq.s32.totalorder %s140, 0
      %s143 = sadd.s32 %s142, 1
      %s144 = scalar_select %p141, %s142, %s143
      %p147 = pneg %p141
      %p148 = scmp.eq.s32.totalorder %s28, 1
      %p149 = por %p147, %p148
      %p150 = scmp.ne.s32.totalorder %s142, %s145
      %p151 = scmp.eq.s32.totalorder %s28, 0
      %p152 = por %p150, %p151
      %p153 = scmp.ne.s32.totalorder %s142, %s145
      %p154 = scmp.eq.s32.totalorder %s33, 1
      %p155 = por %p153, %p154
      %p156 = scmp.ne.s32.totalorder %s145, %s146
      %p157 = scmp.eq.s32.totalorder %s33, 0
      %p158 = por %p156, %p157
      %p159 = scmp.ne.s32.totalorder %s145, %s146
      %p160 = scmp.eq.s32.totalorder %s34, 1
      %p161 = por %p159, %p160
      %p163 = scmp.ne.s32.totalorder %s146, %s162
      %p164 = scmp.eq.s32.totalorder %s34, 0
      %p165 = por %p163, %p164
      %s166 = ssub.s32 %s28, %s35
      %p167 = scmp.eq.s32.totalorder %s166, 0
      %s169 = sadd.s32 %s168, 1
      %s170 = scalar_select %p167, %s168, %s169
      %p173 = pneg %p167
      %p174 = scmp.eq.s32.totalorder %s28, 1
      %p175 = por %p173, %p174
      %p176 = scmp.ne.s32.totalorder %s168, %s171
      %p177 = scmp.eq.s32.totalorder %s28, 0
      %p178 = por %p176, %p177
      %p179 = scmp.ne.s32.totalorder %s168, %s171
      %p180 = scmp.eq.s32.totalorder %s33, 1
      %p181 = por %p179, %p180
      %p182 = scmp.ne.s32.totalorder %s171, %s172
      %p183 = scmp.eq.s32.totalorder %s33, 0
      %p184 = por %p182, %p183
      %p185 = scmp.ne.s32.totalorder %s171, %s172
      %p186 = scmp.eq.s32.totalorder %s34, 1
      %p187 = por %p185, %p186
      %p189 = scmp.ne.s32.totalorder %s172, %s188
      %p190 = scmp.eq.s32.totalorder %s34, 0
      %p191 = por %p189, %p190
      %s192 = ssub.s32 %s28, %s35
      %p193 = scmp.eq.s32.totalorder %s192, 0
      %s195 = sadd.s32 %s194, 1
      %s196 = scalar_select %p193, %s194, %s195
      %p199 = pneg %p193
      %p200 = scmp.eq.s32.totalorder %s28, 1
      %p201 = por %p199, %p200
      %p202 = scmp.ne.s32.totalorder %s194, %s197
      %p203 = scmp.eq.s32.totalorder %s28, 0
      %p204 = por %p202, %p203
      %p205 = scmp.ne.s32.totalorder %s194, %s197
      %p206 = scmp.eq.s32.totalorder %s33, 1
      %p207 = por %p205, %p206
      %p208 = scmp.ne.s32.totalorder %s197, %s198
      %p209 = scmp.eq.s32.totalorder %s33, 0
      %p210 = por %p208, %p209
      %p211 = scmp.ne.s32.totalorder %s197, %s198
      %p212 = scmp.eq.s32.totalorder %s34, 1
      %p213 = por %p211, %p212
      %p215 = scmp.ne.s32.totalorder %s198, %s214
      %p216 = scmp.eq.s32.totalorder %s34, 0
      %p217 = por %p215, %p216
      %p218 = scmp.le.s32.totalorder 1, %s28
      %p219 = scmp.lt.s32.totalorder %s28, 3
      %p220 = pnand %p218, %p219
      %p221 = pneg %p220
      // Predicated region
      $region9: #{tpu_custom_call.1} parent=5 // pred_check
        _
      $region10: #{tpu_custom_call.1} parent=5 // pred_check_branch
        %223 = sbr.rel (%p220) target = $region12
      $region11: #{tpu_custom_call.1} parent=5 // pred_region
        %s224 = ssub.s32 %s28, 1
      $region12: #{tpu_custom_call.1} parent=5 // pred_fallthru
        _
      %p225 = scmp.lt.s32.totalorder %s28, 2
      // Predicated region
      $region13: #{tpu_custom_call.1} parent=5 // pred_check
        %p226 = pneg %p225
      $region14: #{tpu_custom_call.1} parent=5 // pred_check_branch
        %228 = sbr.rel (%p226) target = $region16
      $region15: #{tpu_custom_call.1} parent=5 // pred_region
        // Predicated region
        $region17: #{tpu_custom_call.1} parent=15 // pred_check
          %p229 = pneg %p48
        $region18: #{tpu_custom_call.1} parent=15 // pred_check_branch
          %231 = sbr.rel (%p229) target = $region20
        $region19: #{tpu_custom_call.1} parent=15 // pred_region
          %s232 = sand.u32 %s38, 1
          %s233 = scalar_lea.sflag [#allocation3], %s232
          %s234 = sand.u32 %s38, 1
          %s235 = smul.addr %s234, 16
          %s236 = scalar_lea.vmem [#allocation2], %s235
          %238 = vsyncadd %s233, 0
          %s239 = smul.addr %s28, 8
          %s240 = smul.addr %s239, 2
          %s241 = scalar_lea.hbm %s0, %s240
          %s242 = sshll.u32 %s241, 4
          %s243 = int_to_ptr.hbm [resolvable:$true] %s242
          %s244 = sshll.u32 %s236, 4
          %s245 = int_to_ptr.vmem [resolvable:$true] %s244
          %250 = dma.hbm_to_vmem [thread:$0]  %s243, 256, %s245, %s233, 32, 32, 2
        $region20: #{tpu_custom_call.1} parent=15 // pred_fallthru
          _
        // Predicated region
        $region21: #{tpu_custom_call.1} parent=15 // pred_check
          %p251 = pneg %p74
        $region22: #{tpu_custom_call.1} parent=15 // pred_check_branch
          %253 = sbr.rel (%p251) target = $region24
        $region23: #{tpu_custom_call.1} parent=15 // pred_region
          %s254 = sand.u32 %s28, 1
          %s255 = scalar_lea.sflag [#allocation6], %s254
          %s256 = sand.u32 %s64, 1
          %s257 = smul.addr %s256, 16
          %s258 = scalar_lea.vmem [#allocation5], %s257
          %260 = vsyncadd %s255, 0
          %s261 = smul.addr %s28, 2
          %s262 = smul.addr %s261, 8
          %s263 = scalar_lea.hbm %s1, %s262
          %s264 = sshll.u32 %s263, 4
          %s265 = int_to_ptr.hbm [resolvable:$true] %s264
          %s266 = sshll.u32 %s258, 4
          %s267 = int_to_ptr.vmem [resolvable:$true] %s266
          %272 = dma.hbm_to_vmem [thread:$0]  %s265, 256, %s267, %s255, 128, 128, 8
        $region24: #{tpu_custom_call.1} parent=15 // pred_fallthru
          _
        // Predicated region
        $region25: #{tpu_custom_call.1} parent=15 // pred_check
          %p273 = pneg %p100
        $region26: #{tpu_custom_call.1} parent=15 // pred_check_branch
          %275 = sbr.rel (%p273) target = $region28
        $region27: #{tpu_custom_call.1} parent=15 // pred_region
          %s276 = sand.u32 %s28, 1
          %s277 = scalar_lea.sflag [#allocation6], %s276
          %s278 = sand.u32 %s90, 1
          %s279 = smul.addr %s278, 2
          %s280 = scalar_lea.vmem [#allocation7], %s279
          %282 = vsyncadd %s277, 0
          %s283 = smul.addr %s28, 2
          %s284 = scalar_lea.hbm %s2, %s283
          %s286 = sshll.u32 %s284, 4
          %s287 = int_to_ptr.hbm [resolvable:$true] %s286
          %s288 = sshll.u32 %s280, 4
          %s289 = int_to_ptr.vmem [resolvable:$true] %s288
          %291 = dma.hbm_to_vmem [thread:$0]  %s287, 32, %s289, %s277
        $region28: #{tpu_custom_call.1} parent=15 // pred_fallthru
          _
        // Predicated region
        $region29: #{tpu_custom_call.1} parent=15 // pred_check
          %p292 = pneg %p126
        $region30: #{tpu_custom_call.1} parent=15 // pred_check_branch
          %294 = sbr.rel (%p292) target = $region32
        $region31: #{tpu_custom_call.1} parent=15 // pred_region
          %s295 = sand.u32 %s116, 1
          %s296 = scalar_lea.sflag [#allocation9], %s295
          %s297 = sand.u32 %s116, 1
          %s298 = smul.addr %s297, 2
          %s299 = scalar_lea.vmem [#allocation8], %s298
          %301 = vsyncadd %s296, 0
          %s302 = smul.addr %s28, 2
          %s303 = scalar_lea.hbm %s3, %s302
          %s305 = sshll.u32 %s303, 4
          %s306 = int_to_ptr.hbm [resolvable:$true] %s305
          %s307 = sshll.u32 %s299, 4
          %s308 = int_to_ptr.vmem [resolvable:$true] %s307
          %310 = dma.hbm_to_vmem [thread:$0]  %s306, 32, %s308, %s296
        $region32: #{tpu_custom_call.1} parent=15 // pred_fallthru
          _
      $region16: #{tpu_custom_call.1} parent=5 // pred_fallthru
        _
      %p311 = scmp.le.s32.totalorder 1, %s28
      %p312 = scmp.lt.s32.totalorder %s28, 3
      %p313 = pnand %p311, %p312
      %p314 = pneg %p313
      // Predicated region
      $region33: #{tpu_custom_call.1} parent=5 // pred_check
        _
      $region34: #{tpu_custom_call.1} parent=5 // pred_check_branch
        %316 = sbr.rel (%p313) target = $region36
      $region35: #{tpu_custom_call.1} parent=5 // pred_region
        %s317 = ssub.s32 %s28, 1
        %s318 = sand.u32 %s41, 1
        %s319 = scalar_lea.sflag [#allocation3], %s318
        %s320 = sand.u32 %s41, 1
        %s321 = smul.addr %s320, 16
        %s322 = scalar_lea.vmem [#allocation2], %s321
        // Predicated region
        $region37: #{tpu_custom_call.1} parent=35 // pred_check
          %p323 = pneg %p54
        $region38: #{tpu_custom_call.1} parent=35 // pred_check_branch
          %325 = sbr.rel (%p323) target = $region40
        $region39: #{tpu_custom_call.1} parent=35 // pred_region
          %327 = dma.done %s319, 256
        $region40: #{tpu_custom_call.1} parent=35 // pred_fallthru
          _
        %s328 = sand.u32 %s33, 1
        %s329 = scalar_lea.sflag [#allocation6], %s328
        %s330 = sand.u32 %s67, 1
        %s331 = smul.addr %s330, 16
        %s332 = scalar_lea.vmem [#allocation5], %s331
        // Predicated region
        $region41: #{tpu_custom_call.1} parent=35 // pred_check
          %p333 = pneg %p80
        $region42: #{tpu_custom_call.1} parent=35 // pred_check_branch
          %335 = sbr.rel (%p333) target = $region44
        $region43: #{tpu_custom_call.1} parent=35 // pred_region
          %337 = dma.done %s329, 256
        $region44: #{tpu_custom_call.1} parent=35 // pred_fallthru
          _
        %s338 = sand.u32 %s33, 1
        %s339 = scalar_lea.sflag [#allocation6], %s338
        %s340 = sand.u32 %s93, 1
        %s341 = smul.addr %s340, 2
        %s342 = scalar_lea.vmem [#allocation7], %s341
        // Predicated region
        $region45: #{tpu_custom_call.1} parent=35 // pred_check
          %p343 = pneg %p106
        $region46: #{tpu_custom_call.1} parent=35 // pred_check_branch
          %345 = sbr.rel (%p343) target = $region48
        $region47: #{tpu_custom_call.1} parent=35 // pred_region
          %347 = dma.done %s339, 32
        $region48: #{tpu_custom_call.1} parent=35 // pred_fallthru
          _
        %s348 = sand.u32 %s119, 1
        %s349 = scalar_lea.sflag [#allocation9], %s348
        %s350 = sand.u32 %s119, 1
        %s351 = smul.addr %s350, 2
        %s352 = scalar_lea.vmem [#allocation8], %s351
        // Predicated region
        $region49: #{tpu_custom_call.1} parent=35 // pred_check
          %p353 = pneg %p132
        $region50: #{tpu_custom_call.1} parent=35 // pred_check_branch
          %355 = sbr.rel (%p353) target = $region52
        $region51: #{tpu_custom_call.1} parent=35 // pred_region
          %357 = dma.done %s349, 32
        $region52: #{tpu_custom_call.1} parent=35 // pred_fallthru
          _
        %s358 = sand.u32 %s41, 1
        %s359 = scalar_lea.sflag [#allocation3], %s358
        %s360 = sand.u32 %s41, 1
        %s361 = smul.addr %s360, 16
        %s362 = scalar_lea.vmem [#allocation2], %s361
        %p363 = pneg %p54
        %p364 = pneg %p51
        %s365 = sand.u32 %s33, 1
        %s366 = scalar_lea.sflag [#allocation6], %s365
        %s367 = sand.u32 %s67, 1
        %s368 = smul.addr %s367, 16
        %s369 = scalar_lea.vmem [#allocation5], %s368
        %p370 = pneg %p80
        %p371 = pneg %p77
        %s372 = sand.u32 %s33, 1
        %s373 = scalar_lea.sflag [#allocation6], %s372
        %s374 = sand.u32 %s93, 1
        %s375 = smul.addr %s374, 2
        %s376 = scalar_lea.vmem [#allocation7], %s375
        %p377 = pneg %p106
        %p378 = pneg %p103
        %s379 = sand.u32 %s119, 1
        %s380 = scalar_lea.sflag [#allocation9], %s379
        %s381 = sand.u32 %s119, 1
        %s382 = smul.addr %s381, 2
        %s383 = scalar_lea.vmem [#allocation8], %s382
        %p384 = pneg %p132
        %p385 = pneg %p129
        %p386 = pneg %p158
        %p387 = pneg %p155
        %s388 = sand.u32 %s145, 1
        %s389 = scalar_lea.sflag [#allocation4], %s388
        %s390 = sand.u32 %s145, 1
        %s391 = smul.addr %s390, 16
        %s392 = scalar_lea.vmem [#allocation10], %s391
        %p393 = pneg %p184
        %p394 = pneg %p181
        %s395 = sand.u32 %s33, 1
        %s396 = scalar_lea.sflag [#allocation12], %s395
        %s397 = sand.u32 %s171, 1
        %s398 = smul.addr %s397, 2
        %s399 = scalar_lea.vmem [#allocation11], %s398
        %p400 = pneg %p210
        %p401 = pneg %p207
        %s402 = sand.u32 %s33, 1
        %s403 = scalar_lea.sflag [#allocation12], %s402
        %s404 = sand.u32 %s197, 1
        %s405 = smul.addr %s404, 2
        %s406 = scalar_lea.vmem [#allocation13], %s405
        %s407 = smul.u32 %s33, 7
        %s408 = smul.u32 %s33, 2
        %s409 = ssub.s32 1, %s408
        %v410 = vld [vmem:[%s342] sm:$0x3]
        %v411 = vld [vmem:[%s352] sm:$0x3]
        %s412 = smul.u32 %s407, 2
        %s413 = scalar_lea.vmem %s322, %s412 [#allocation2]
        %v414 = vld [vmem:[%s413] sm:$0x3]
        %v415 = vld [vmem:[%s332] sm:$0xff]
        %v416 = vld [vmem:[%s332 + $0x8] sm:$0xff]
        %vm417 = vcmask 130048
        %v419 = vsel %vm417, %v410, 0
        %421 = vmatpush.msra.mxu0 0.0
        %422 = vmatpush.msra.mxu0 0.0
        %423 = vmatpush.msra.mxu0 0.0
        %424 = vmatpush.msra.mxu0 0.0
        %425 = vmatpush.msra.mxu0 0.0
        %426 = vmatpush.msra.mxu0 0.0
        %427 = vmatpush.msra.mxu0 0.0
        %428 = vmatpush.msra.mxu0 0.0
        %429 = vmatpush.msra.mxu0 0.0
        %430 = vmatpush.msra.mxu0 0.0
        %431 = vmatpush.msra.mxu0 0.0
        %432 = vmatpush.msra.mxu0 0.0
        %433 = vmatpush.msra.mxu0 0.0
        %434 = vmatpush.msra.mxu0 0.0
        %435 = vmatpush.msra.mxu0 %v416
        %436 = vmatpush.msra.mxu0 %v415
        %437 = vmatmul.f32.gmra.mxu0 %v419
        %v438 = vpop.f32.mrf.mxu0
        %v439 = vadd.f32 0.0, %v438
        %440 = vdwg.mxu0
        %v441 = vadd.f32 %v414, %v439
        %v442 = vxor.u32 %v441, 2147483648
        %v443 = vmul.f32 %v442, 1.442695
        %v444 = vpow.pop %v443
        %v445 = vadd.f32 %v444, 1.0
        %v446 = vrcp.pop %v445
        %v447 = vmul.f32 %v445, %v446
        %v448 = vsub.f32 1.0, %v447
        %v449 = vmul.f32 %v446, %v448
        %v450 = vadd.f32 %v446, %v449
        %vm451 = vweird.f32 %v445
        %vm452 = vweird.f32 %v446
        %vm453 = vmor %vm451, %vm452
        %v454 = vsel %vm453, %v446, %v450
        %v455 = vand.u32 2147483647, %v445
        %vm456 = vcmp.eq.f32.partialorder %v455, 8.507059e+37
        %v457 = vand.u32 %v445, 2147483648
        %v458 = vor.u32 1.1754944e-38, %v457
        %v459 = vsel %vm456, %v458, %v454
        %v460 = vmul.f32 1.0, %v459
        %v461 = vtanh.pop %v441
        %463 = vrot.lane.b32.xlu0 %v411, 16
        %v464 = vpop.permute.xlu0 %463
        %v466 = vmul.f32 %v460, %v464
        %468 = vrot.lane.b32.xlu0 %v461, 96
        %v469 = vpop.permute.xlu0 %468
        %v471 = vmul.f32 %v460, %v469
        %473 = vrot.lane.b32.xlu0 %v471, 16
        %v474 = vpop.permute.xlu0 %473
        %v476 = vadd.f32 %v466, %v474
        %v477 = vtanh.pop %v476
        %479 = vrot.lane.b32.xlu0 %v477, 32
        %v480 = vpop.permute.xlu0 %479
        %v482 = vmul.f32 %v460, %v480
        %484 = vrot.lane.b32.xlu0 %v482, 80
        %v485 = vpop.permute.xlu0 %484
        %s487 = scalar_lea.vmem %s392, %s412 [#allocation10]
        %vm488 = vcmask 123904
        %489 = vst.msk [vmem:[%s487] sm:$0x3] %vm488, %v485
        %s490 = sadd.s32 %s407, %s409
        %s491 = smul.u32 %s490, 2
        %s492 = scalar_lea.vmem %s322, %s491 [#allocation2]
        %v493 = vld [vmem:[%s492] sm:$0x3]
        %v494 = vld [vmem:[%s332] sm:$0xff]
        %v495 = vld [vmem:[%s332 + $0x8] sm:$0xff]
        %v496 = vsel %vm417, %v485, 0
        %498 = vmatpush.msra.mxu0 0.0
        %499 = vmatpush.msra.mxu0 0.0
        %500 = vmatpush.msra.mxu0 0.0
        %501 = vmatpush.msra.mxu0 0.0
        %502 = vmatpush.msra.mxu0 0.0
        %503 = vmatpush.msra.mxu0 0.0
        %504 = vmatpush.msra.mxu0 0.0
        %505 = vmatpush.msra.mxu0 0.0
        %506 = vmatpush.msra.mxu0 0.0
        %507 = vmatpush.msra.mxu0 0.0
        %508 = vmatpush.msra.mxu0 0.0
        %509 = vmatpush.msra.mxu0 0.0
        %510 = vmatpush.msra.mxu0 0.0
        %511 = vmatpush.msra.mxu0 0.0
        %512 = vmatpush.msra.mxu0 %v495
        %513 = vmatpush.msra.mxu0 %v494
        %514 = vmatmul.f32.gmra.mxu0 %v496
        %v515 = vpop.f32.mrf.mxu0
        %v516 = vadd.f32 0.0, %v515
        %517 = vdwg.mxu0
        %v518 = vadd.f32 %v493, %v516
        %v519 = vxor.u32 %v518, 2147483648
        %v520 = vmul.f32 %v519, 1.442695
        %v521 = vpow.pop %v520
        %v522 = vadd.f32 %v521, 1.0
        %v523 = vrcp.pop %v522
        %v524 = vmul.f32 %v522, %v523
        %v525 = vsub.f32 1.0, %v524
        %v526 = vmul.f32 %v523, %v525
        %v527 = vadd.f32 %v523, %v526
        %vm528 = vweird.f32 %v522
        %vm529 = vweird.f32 %v523
        %vm530 = vmor %vm528, %vm529
        %v531 = vsel %vm530, %v523, %v527
        %v532 = vand.u32 2147483647, %v522
        %vm533 = vcmp.eq.f32.partialorder %v532, 8.507059e+37
        %v534 = vand.u32 %v522, 2147483648
        %v535 = vor.u32 1.1754944e-38, %v534
        %v536 = vsel %vm533, %v535, %v531
        %v537 = vmul.f32 1.0, %v536
        %v538 = vtanh.pop %v518
        %v539 = vmul.f32 %v537, %v476
        %541 = vrot.lane.b32.xlu0 %v538, 96
        %v542 = vpop.permute.xlu0 %541
        %v544 = vmul.f32 %v537, %v542
        %546 = vrot.lane.b32.xlu0 %v544, 16
        %v547 = vpop.permute.xlu0 %546
        %v549 = vadd.f32 %v539, %v547
        %v550 = vtanh.pop %v549
        %552 = vrot.lane.b32.xlu0 %v550, 32
        %v553 = vpop.permute.xlu0 %552
        %v555 = vmul.f32 %v537, %v553
        %557 = vrot.lane.b32.xlu0 %v555, 80
        %v558 = vpop.permute.xlu0 %557
        %s560 = scalar_lea.vmem %s392, %s491 [#allocation10]
        %561 = vst.msk [vmem:[%s560] sm:$0x3] %vm488, %v558
        %s562 = smul.u32 %s409, 2
        %s563 = sadd.s32 %s407, %s562
        %s564 = smul.u32 %s563, 2
        %s565 = scalar_lea.vmem %s322, %s564 [#allocation2]
        %v566 = vld [vmem:[%s565] sm:$0x3]
        %v567 = vld [vmem:[%s332] sm:$0xff]
        %v568 = vld [vmem:[%s332 + $0x8] sm:$0xff]
        %v569 = vsel %vm417, %v558, 0
        %571 = vmatpush.msra.mxu0 0.0
        %572 = vmatpush.msra.mxu0 0.0
        %573 = vmatpush.msra.mxu0 0.0
        %574 = vmatpush.msra.mxu0 0.0
        %575 = vmatpush.msra.mxu0 0.0
        %576 = vmatpush.msra.mxu0 0.0
        %577 = vmatpush.msra.mxu0 0.0
        %578 = vmatpush.msra.mxu0 0.0
        %579 = vmatpush.msra.mxu0 0.0
        %580 = vmatpush.msra.mxu0 0.0
        %581 = vmatpush.msra.mxu0 0.0
        %582 = vmatpush.msra.mxu0 0.0
        %583 = vmatpush.msra.mxu0 0.0
        %584 = vmatpush.msra.mxu0 0.0
        %585 = vmatpush.msra.mxu0 %v568
        %586 = vmatpush.msra.mxu0 %v567
        %587 = vmatmul.f32.gmra.mxu0 %v569
        %v588 = vpop.f32.mrf.mxu0
        %v589 = vadd.f32 0.0, %v588
        %590 = vdwg.mxu0
        %v591 = vadd.f32 %v566, %v589
        %v592 = vxor.u32 %v591, 2147483648
        %v593 = vmul.f32 %v592, 1.442695
        %v594 = vpow.pop %v593
        %v595 = vadd.f32 %v594, 1.0
        %v596 = vrcp.pop %v595
        %v597 = vmul.f32 %v595, %v596
        %v598 = vsub.f32 1.0, %v597
        %v599 = vmul.f32 %v596, %v598
        %v600 = vadd.f32 %v596, %v599
        %vm601 = vweird.f32 %v595
        %vm602 = vweird.f32 %v596
        %vm603 = vmor %vm601, %vm602
        %v604 = vsel %vm603, %v596, %v600
        %v605 = vand.u32 2147483647, %v595
        %vm606 = vcmp.eq.f32.partialorder %v605, 8.507059e+37
        %v607 = vand.u32 %v595, 2147483648
        %v608 = vor.u32 1.1754944e-38, %v607
        %v609 = vsel %vm606, %v608, %v604
        %v610 = vmul.f32 1.0, %v609
        %v611 = vtanh.pop %v591
        %v612 = vmul.f32 %v610, %v549
        %614 = vrot.lane.b32.xlu0 %v611, 96
        %v615 = vpop.permute.xlu0 %614
        %v617 = vmul.f32 %v610, %v615
        %619 = vrot.lane.b32.xlu0 %v617, 16
        %v620 = vpop.permute.xlu0 %619
        %v622 = vadd.f32 %v612, %v620
        %v623 = vtanh.pop %v622
        %625 = vrot.lane.b32.xlu0 %v623, 32
        %v626 = vpop.permute.xlu0 %625
        %v628 = vmul.f32 %v610, %v626
        %630 = vrot.lane.b32.xlu0 %v628, 80
        %v631 = vpop.permute.xlu0 %630
        %s633 = scalar_lea.vmem %s392, %s564 [#allocation10]
        %634 = vst.msk [vmem:[%s633] sm:$0x3] %vm488, %v631
        %s635 = smul.u32 %s409, 3
        %s636 = sadd.s32 %s407, %s635
        %s637 = smul.u32 %s636, 2
        %s638 = scalar_lea.vmem %s322, %s637 [#allocation2]
        %v639 = vld [vmem:[%s638] sm:$0x3]
        %v640 = vld [vmem:[%s332] sm:$0xff]
        %v641 = vld [vmem:[%s332 + $0x8] sm:$0xff]
        %v642 = vsel %vm417, %v631, 0
        %644 = vmatpush.msra.mxu0 0.0
        %645 = vmatpush.msra.mxu0 0.0
        %646 = vmatpush.msra.mxu0 0.0
        %647 = vmatpush.msra.mxu0 0.0
        %648 = vmatpush.msra.mxu0 0.0
        %649 = vmatpush.msra.mxu0 0.0
        %650 = vmatpush.msra.mxu0 0.0
        %651 = vmatpush.msra.mxu0 0.0
        %652 = vmatpush.msra.mxu0 0.0
        %653 = vmatpush.msra.mxu0 0.0
        %654 = vmatpush.msra.mxu0 0.0
        %655 = vmatpush.msra.mxu0 0.0
        %656 = vmatpush.msra.mxu0 0.0
        %657 = vmatpush.msra.mxu0 0.0
        %658 = vmatpush.msra.mxu0 %v641
        %659 = vmatpush.msra.mxu0 %v640
        %660 = vmatmul.f32.gmra.mxu0 %v642
        %v661 = vpop.f32.mrf.mxu0
        %v662 = vadd.f32 0.0, %v661
        %663 = vdwg.mxu0
        %v664 = vadd.f32 %v639, %v662
        %v665 = vxor.u32 %v664, 2147483648
        %v666 = vmul.f32 %v665, 1.442695
        %v667 = vpow.pop %v666
        %v668 = vadd.f32 %v667, 1.0
        %v669 = vrcp.pop %v668
        %v670 = vmul.f32 %v668, %v669
        %v671 = vsub.f32 1.0, %v670
        %v672 = vmul.f32 %v669, %v671
        %v673 = vadd.f32 %v669, %v672
        %vm674 = vweird.f32 %v668
        %vm675 = vweird.f32 %v669
        %vm676 = vmor %vm674, %vm675
        %v677 = vsel %vm676, %v669, %v673
        %v678 = vand.u32 2147483647, %v668
        %vm679 = vcmp.eq.f32.partialorder %v678, 8.507059e+37
        %v680 = vand.u32 %v668, 2147483648
        %v681 = vor.u32 1.1754944e-38, %v680
        %v682 = vsel %vm679, %v681, %v677
        %v683 = vmul.f32 1.0, %v682
        %v684 = vtanh.pop %v664
        %v685 = vmul.f32 %v683, %v622
        %687 = vrot.lane.b32.xlu0 %v684, 96
        %v688 = vpop.permute.xlu0 %687
        %v690 = vmul.f32 %v683, %v688
        %692 = vrot.lane.b32.xlu0 %v690, 16
        %v693 = vpop.permute.xlu0 %692
        %v695 = vadd.f32 %v685, %v693
        %v696 = vtanh.pop %v695
        %698 = vrot.lane.b32.xlu0 %v696, 32
        %v699 = vpop.permute.xlu0 %698
        %v701 = vmul.f32 %v683, %v699
        %703 = vrot.lane.b32.xlu0 %v701, 80
        %v704 = vpop.permute.xlu0 %703
        %s706 = scalar_lea.vmem %s392, %s637 [#allocation10]
        %707 = vst.msk [vmem:[%s706] sm:$0x3] %vm488, %v704
        %s708 = smul.u32 %s409, 4
        %s709 = sadd.s32 %s407, %s708
        %s710 = smul.u32 %s709, 2
        %s711 = scalar_lea.vmem %s322, %s710 [#allocation2]
        %v712 = vld [vmem:[%s711] sm:$0x3]
        %v713 = vld [vmem:[%s332] sm:$0xff]
        %v714 = vld [vmem:[%s332 + $0x8] sm:$0xff]
        %v715 = vsel %vm417, %v704, 0
        %717 = vmatpush.msra.mxu0 0.0
        %718 = vmatpush.msra.mxu0 0.0
        %719 = vmatpush.msra.mxu0 0.0
        %720 = vmatpush.msra.mxu0 0.0
        %721 = vmatpush.msra.mxu0 0.0
        %722 = vmatpush.msra.mxu0 0.0
        %723 = vmatpush.msra.mxu0 0.0
        %724 = vmatpush.msra.mxu0 0.0
        %725 = vmatpush.msra.mxu0 0.0
        %726 = vmatpush.msra.mxu0 0.0
        %727 = vmatpush.msra.mxu0 0.0
        %728 = vmatpush.msra.mxu0 0.0
        %729 = vmatpush.msra.mxu0 0.0
        %730 = vmatpush.msra.mxu0 0.0
        %731 = vmatpush.msra.mxu0 %v714
        %732 = vmatpush.msra.mxu0 %v713
        %733 = vmatmul.f32.gmra.mxu0 %v715
        %v734 = vpop.f32.mrf.mxu0
        %v735 = vadd.f32 0.0, %v734
        %736 = vdwg.mxu0
        %v737 = vadd.f32 %v712, %v735
        %v738 = vxor.u32 %v737, 2147483648
        %v739 = vmul.f32 %v738, 1.442695
        %v740 = vpow.pop %v739
        %v741 = vadd.f32 %v740, 1.0
        %v742 = vrcp.pop %v741
        %v743 = vmul.f32 %v741, %v742
        %v744 = vsub.f32 1.0, %v743
        %v745 = vmul.f32 %v742, %v744
        %v746 = vadd.f32 %v742, %v745
        %vm747 = vweird.f32 %v741
        %vm748 = vweird.f32 %v742
        %vm749 = vmor %vm747, %vm748
        %v750 = vsel %vm749, %v742, %v746
        %v751 = vand.u32 2147483647, %v741
        %vm752 = vcmp.eq.f32.partialorder %v751, 8.507059e+37
        %v753 = vand.u32 %v741, 2147483648
        %v754 = vor.u32 1.1754944e-38, %v753
        %v755 = vsel %vm752, %v754, %v750
        %v756 = vmul.f32 1.0, %v755
        %v757 = vtanh.pop %v737
        %v758 = vmul.f32 %v756, %v695
        %760 = vrot.lane.b32.xlu0 %v757, 96
        %v761 = vpop.permute.xlu0 %760
        %v763 = vmul.f32 %v756, %v761
        %765 = vrot.lane.b32.xlu0 %v763, 16
        %v766 = vpop.permute.xlu0 %765
        %v768 = vadd.f32 %v758, %v766
        %v769 = vtanh.pop %v768
        %771 = vrot.lane.b32.xlu0 %v769, 32
        %v772 = vpop.permute.xlu0 %771
        %v774 = vmul.f32 %v756, %v772
        %776 = vrot.lane.b32.xlu0 %v774, 80
        %v777 = vpop.permute.xlu0 %776
        %s779 = scalar_lea.vmem %s392, %s710 [#allocation10]
        %780 = vst.msk [vmem:[%s779] sm:$0x3] %vm488, %v777
        %s781 = smul.u32 %s409, 5
        %s782 = sadd.s32 %s407, %s781
        %s783 = smul.u32 %s782, 2
        %s784 = scalar_lea.vmem %s322, %s783 [#allocation2]
        %v785 = vld [vmem:[%s784] sm:$0x3]
        %v786 = vld [vmem:[%s332] sm:$0xff]
        %v787 = vld [vmem:[%s332 + $0x8] sm:$0xff]
        %v788 = vsel %vm417, %v777, 0
        %790 = vmatpush.msra.mxu0 0.0
        %791 = vmatpush.msra.mxu0 0.0
        %792 = vmatpush.msra.mxu0 0.0
        %793 = vmatpush.msra.mxu0 0.0
        %794 = vmatpush.msra.mxu0 0.0
        %795 = vmatpush.msra.mxu0 0.0
        %796 = vmatpush.msra.mxu0 0.0
        %797 = vmatpush.msra.mxu0 0.0
        %798 = vmatpush.msra.mxu0 0.0
        %799 = vmatpush.msra.mxu0 0.0
        %800 = vmatpush.msra.mxu0 0.0
        %801 = vmatpush.msra.mxu0 0.0
        %802 = vmatpush.msra.mxu0 0.0
        %803 = vmatpush.msra.mxu0 0.0
        %804 = vmatpush.msra.mxu0 %v787
        %805 = vmatpush.msra.mxu0 %v786
        %806 = vmatmul.f32.gmra.mxu0 %v788
        %v807 = vpop.f32.mrf.mxu0
        %v808 = vadd.f32 0.0, %v807
        %809 = vdwg.mxu0
        %v810 = vadd.f32 %v785, %v808
        %v811 = vxor.u32 %v810, 2147483648
        %v812 = vmul.f32 %v811, 1.442695
        %v813 = vpow.pop %v812
        %v814 = vadd.f32 %v813, 1.0
        %v815 = vrcp.pop %v814
        %v816 = vmul.f32 %v814, %v815
        %v817 = vsub.f32 1.0, %v816
        %v818 = vmul.f32 %v815, %v817
        %v819 = vadd.f32 %v815, %v818
        %vm820 = vweird.f32 %v814
        %vm821 = vweird.f32 %v815
        %vm822 = vmor %vm820, %vm821
        %v823 = vsel %vm822, %v815, %v819
        %v824 = vand.u32 2147483647, %v814
        %vm825 = vcmp.eq.f32.partialorder %v824, 8.507059e+37
        %v826 = vand.u32 %v814, 2147483648
        %v827 = vor.u32 1.1754944e-38, %v826
        %v828 = vsel %vm825, %v827, %v823
        %v829 = vmul.f32 1.0, %v828
        %v830 = vtanh.pop %v810
        %v831 = vmul.f32 %v829, %v768
        %833 = vrot.lane.b32.xlu0 %v830, 96
        %v834 = vpop.permute.xlu0 %833
        %v836 = vmul.f32 %v829, %v834
        %838 = vrot.lane.b32.xlu0 %v836, 16
        %v839 = vpop.permute.xlu0 %838
        %v841 = vadd.f32 %v831, %v839
        %v842 = vtanh.pop %v841
        %844 = vrot.lane.b32.xlu0 %v842, 32
        %v845 = vpop.permute.xlu0 %844
        %v847 = vmul.f32 %v829, %v845
        %849 = vrot.lane.b32.xlu0 %v847, 80
        %v850 = vpop.permute.xlu0 %849
        %s852 = scalar_lea.vmem %s392, %s783 [#allocation10]
        %853 = vst.msk [vmem:[%s852] sm:$0x3] %vm488, %v850
        %s854 = smul.u32 %s409, 6
        %s855 = sadd.s32 %s407, %s854
        %s856 = smul.u32 %s855, 2
        %s857 = scalar_lea.vmem %s322, %s856 [#allocation2]
        %v858 = vld [vmem:[%s857] sm:$0x3]
        %v859 = vld [vmem:[%s332] sm:$0xff]
        %v860 = vld [vmem:[%s332 + $0x8] sm:$0xff]
        %v861 = vsel %vm417, %v850, 0
        %863 = vmatpush.msra.mxu0 0.0
        %864 = vmatpush.msra.mxu0 0.0
        %865 = vmatpush.msra.mxu0 0.0
        %866 = vmatpush.msra.mxu0 0.0
        %867 = vmatpush.msra.mxu0 0.0
        %868 = vmatpush.msra.mxu0 0.0
        %869 = vmatpush.msra.mxu0 0.0
        %870 = vmatpush.msra.mxu0 0.0
        %871 = vmatpush.msra.mxu0 0.0
        %872 = vmatpush.msra.mxu0 0.0
        %873 = vmatpush.msra.mxu0 0.0
        %874 = vmatpush.msra.mxu0 0.0
        %875 = vmatpush.msra.mxu0 0.0
        %876 = vmatpush.msra.mxu0 0.0
        %877 = vmatpush.msra.mxu0 %v860
        %878 = vmatpush.msra.mxu0 %v859
        %879 = vmatmul.f32.gmra.mxu0 %v861
        %v880 = vpop.f32.mrf.mxu0
        %v881 = vadd.f32 0.0, %v880
        %882 = vdwg.mxu0
        %v883 = vadd.f32 %v858, %v881
        %v884 = vxor.u32 %v883, 2147483648
        %v885 = vmul.f32 %v884, 1.442695
        %v886 = vpow.pop %v885
        %v887 = vadd.f32 %v886, 1.0
        %v888 = vrcp.pop %v887
        %v889 = vmul.f32 %v887, %v888
        %v890 = vsub.f32 1.0, %v889
        %v891 = vmul.f32 %v888, %v890
        %v892 = vadd.f32 %v888, %v891
        %vm893 = vweird.f32 %v887
        %vm894 = vweird.f32 %v888
        %vm895 = vmor %vm893, %vm894
        %v896 = vsel %vm895, %v888, %v892
        %v897 = vand.u32 2147483647, %v887
        %vm898 = vcmp.eq.f32.partialorder %v897, 8.507059e+37
        %v899 = vand.u32 %v887, 2147483648
        %v900 = vor.u32 1.1754944e-38, %v899
        %v901 = vsel %vm898, %v900, %v896
        %v902 = vmul.f32 1.0, %v901
        %v903 = vtanh.pop %v883
        %v904 = vmul.f32 %v902, %v841
        %906 = vrot.lane.b32.xlu0 %v903, 96
        %v907 = vpop.permute.xlu0 %906
        %v909 = vmul.f32 %v902, %v907
        %911 = vrot.lane.b32.xlu0 %v909, 16
        %v912 = vpop.permute.xlu0 %911
        %v914 = vadd.f32 %v904, %v912
        %v915 = vtanh.pop %v914
        %917 = vrot.lane.b32.xlu0 %v915, 32
        %v918 = vpop.permute.xlu0 %917
        %v920 = vmul.f32 %v902, %v918
        %922 = vrot.lane.b32.xlu0 %v920, 80
        %v923 = vpop.permute.xlu0 %922
        %s925 = scalar_lea.vmem %s392, %s856 [#allocation10]
        %926 = vst.msk [vmem:[%s925] sm:$0x3] %vm488, %v923
        %s927 = smul.u32 %s409, 7
        %s928 = sadd.s32 %s407, %s927
        %s929 = smul.u32 %s928, 2
        %s930 = scalar_lea.vmem %s322, %s929 [#allocation2]
        %v931 = vld [vmem:[%s930] sm:$0x3]
        %v932 = vld [vmem:[%s332] sm:$0xff]
        %v933 = vld [vmem:[%s332 + $0x8] sm:$0xff]
        %v934 = vsel %vm417, %v923, 0
        %936 = vmatpush.msra.mxu0 0.0
        %937 = vmatpush.msra.mxu0 0.0
        %938 = vmatpush.msra.mxu0 0.0
        %939 = vmatpush.msra.mxu0 0.0
        %940 = vmatpush.msra.mxu0 0.0
        %941 = vmatpush.msra.mxu0 0.0
        %942 = vmatpush.msra.mxu0 0.0
        %943 = vmatpush.msra.mxu0 0.0
        %944 = vmatpush.msra.mxu0 0.0
        %945 = vmatpush.msra.mxu0 0.0
        %946 = vmatpush.msra.mxu0 0.0
        %947 = vmatpush.msra.mxu0 0.0
        %948 = vmatpush.msra.mxu0 0.0
        %949 = vmatpush.msra.mxu0 0.0
        %950 = vmatpush.msra.mxu0 %v933
        %951 = vmatpush.msra.mxu0 %v932
        %952 = vmatmul.f32.gmra.mxu0 %v934
        %v953 = vpop.f32.mrf.mxu0
        %v954 = vadd.f32 0.0, %v953
        %955 = vdwg.mxu0
        %v956 = vadd.f32 %v931, %v954
        %v957 = vxor.u32 %v956, 2147483648
        %v958 = vmul.f32 %v957, 1.442695
        %v959 = vpow.pop %v958
        %v960 = vadd.f32 %v959, 1.0
        %v961 = vrcp.pop %v960
        %v962 = vmul.f32 %v960, %v961
        %v963 = vsub.f32 1.0, %v962
        %v964 = vmul.f32 %v961, %v963
        %v965 = vadd.f32 %v961, %v964
        %vm966 = vweird.f32 %v960
        %vm967 = vweird.f32 %v961
        %vm968 = vmor %vm966, %vm967
        %v969 = vsel %vm968, %v961, %v965
        %v970 = vand.u32 2147483647, %v960
        %vm971 = vcmp.eq.f32.partialorder %v970, 8.507059e+37
        %v972 = vand.u32 %v960, 2147483648
        %v973 = vor.u32 1.1754944e-38, %v972
        %v974 = vsel %vm971, %v973, %v969
        %v975 = vmul.f32 1.0, %v974
        %v976 = vtanh.pop %v956
        %v977 = vmul.f32 %v975, %v914
        %979 = vrot.lane.b32.xlu0 %v976, 96
        %v980 = vpop.permute.xlu0 %979
        %v982 = vmul.f32 %v975, %v980
        %984 = vrot.lane.b32.xlu0 %v982, 16
        %v985 = vpop.permute.xlu0 %984
        %v987 = vadd.f32 %v977, %v985
        %v988 = vtanh.pop %v987
        %990 = vrot.lane.b32.xlu0 %v988, 32
        %v991 = vpop.permute.xlu0 %990
        %v993 = vmul.f32 %v975, %v991
        %995 = vrot.lane.b32.xlu0 %v993, 80
        %v996 = vpop.permute.xlu0 %995
        %s998 = scalar_lea.vmem %s392, %s929 [#allocation10]
        %999 = vst.msk [vmem:[%s998] sm:$0x3] %vm488, %v996
        %1000 = vst.msk [vmem:[%s399] sm:$0x3] %vm488, %v996
        %1002 = vrot.lane.b32.xlu0 %v987, 112
        %v1003 = vpop.permute.xlu0 %1002
        %1005 = vst.msk [vmem:[%s406] sm:$0x3] %vm488, %v1003
        %s1006 = sand.u32 %s145, 1
        %s1007 = scalar_lea.sflag [#allocation4], %s1006
        %s1008 = sand.u32 %s145, 1
        %s1009 = smul.addr %s1008, 16
        %s1010 = scalar_lea.vmem [#allocation10], %s1009
        %s1011 = sand.u32 %s33, 1
        %s1012 = scalar_lea.sflag [#allocation12], %s1011
        %s1013 = sand.u32 %s171, 1
        %s1014 = smul.addr %s1013, 2
        %s1015 = scalar_lea.vmem [#allocation11], %s1014
        %s1016 = sand.u32 %s33, 1
        %s1017 = scalar_lea.sflag [#allocation12], %s1016
        %s1018 = sand.u32 %s197, 1
        %s1019 = smul.addr %s1018, 2
        %s1020 = scalar_lea.vmem [#allocation13], %s1019
        // Predicated region
        $region53: #{tpu_custom_call.1} parent=35 // pred_check
          %p1021 = pneg %p155
        $region54: #{tpu_custom_call.1} parent=35 // pred_check_branch
          %1023 = sbr.rel (%p1021) target = $region56
        $region55: #{tpu_custom_call.1} parent=35 // pred_region
          %1025 = vsyncadd %s1007, 0
          %s1026 = smul.addr %s33, 8
          %s1027 = smul.addr %s1026, 2
          %s1028 = scalar_lea.hbm %s4, %s1027
          %s1029 = sshll.u32 %s1010, 4
          %s1030 = int_to_ptr.vmem [resolvable:$true] %s1029
          %s1031 = sshll.u32 %s1028, 4
          %s1032 = int_to_ptr.hbm [resolvable:$true] %s1031
          %1037 = dma.vmem_to_hbm [thread:$0]  %s1030, 256, %s1032, %s1007, 32, 32, 2
        $region56: #{tpu_custom_call.1} parent=35 // pred_fallthru
          _
        // Predicated region
        $region57: #{tpu_custom_call.1} parent=35 // pred_check
          %p1038 = pneg %p181
        $region58: #{tpu_custom_call.1} parent=35 // pred_check_branch
          %1040 = sbr.rel (%p1038) target = $region60
        $region59: #{tpu_custom_call.1} parent=35 // pred_region
          %1042 = vsyncadd %s1012, 0
          %s1043 = smul.addr %s33, 2
          %s1044 = scalar_lea.hbm %s5, %s1043
          %s1046 = sshll.u32 %s1015, 4
          %s1047 = int_to_ptr.vmem [resolvable:$true] %s1046
          %s1048 = sshll.u32 %s1044, 4
          %s1049 = int_to_ptr.hbm [resolvable:$true] %s1048
          %1051 = dma.vmem_to_hbm [thread:$0]  %s1047, 32, %s1049, %s1012
        $region60: #{tpu_custom_call.1} parent=35 // pred_fallthru
          _
        // Predicated region
        $region61: #{tpu_custom_call.1} parent=35 // pred_check
          %p1052 = pneg %p207
        $region62: #{tpu_custom_call.1} parent=35 // pred_check_branch
          %1054 = sbr.rel (%p1052) target = $region64
        $region63: #{tpu_custom_call.1} parent=35 // pred_region
          %1056 = vsyncadd %s1017, 0
          %s1057 = smul.addr %s33, 2
          %s1058 = scalar_lea.hbm %s6, %s1057
          %s1060 = sshll.u32 %s1020, 4
          %s1061 = int_to_ptr.vmem [resolvable:$true] %s1060
          %s1062 = sshll.u32 %s1058, 4
          %s1063 = int_to_ptr.hbm [resolvable:$true] %s1062
          %1065 = dma.vmem_to_hbm [thread:$0]  %s1061, 32, %s1063, %s1017
        $region64: #{tpu_custom_call.1} parent=35 // pred_fallthru
          _
      $region36: #{tpu_custom_call.1} parent=5 // pred_fallthru
        _
      %p1066 = scmp.le.s32.totalorder 2, %s28
      // Predicated region
      $region65: #{tpu_custom_call.1} parent=5 // pred_check
        %p1067 = pneg %p1066
      $region66: #{tpu_custom_call.1} parent=5 // pred_check_branch
        %1069 = sbr.rel (%p1067) target = $region68
      $region67: #{tpu_custom_call.1} parent=5 // pred_region
        %s1070 = ssub.s32 %s28, 2
        // Predicated region
        $region69: #{tpu_custom_call.1} parent=67 // pred_check
          %p1071 = pneg %p161
        $region70: #{tpu_custom_call.1} parent=67 // pred_check_branch
          %1073 = sbr.rel (%p1071) target = $region72
        $region71: #{tpu_custom_call.1} parent=67 // pred_region
          %s1074 = sand.u32 %s146, 1
          %s1075 = scalar_lea.sflag [#allocation4], %s1074
          %s1076 = sand.u32 %s146, 1
          %s1077 = smul.addr %s1076, 16
          %s1078 = scalar_lea.vmem [#allocation10], %s1077
          %1080 = dma.done %s1075, 256
        $region72: #{tpu_custom_call.1} parent=67 // pred_fallthru
          _
        // Predicated region
        $region73: #{tpu_custom_call.1} parent=67 // pred_check
          %p1081 = pneg %p187
        $region74: #{tpu_custom_call.1} parent=67 // pred_check_branch
          %1083 = sbr.rel (%p1081) target = $region76
        $region75: #{tpu_custom_call.1} parent=67 // pred_region
          %s1084 = sand.u32 %s34, 1
          %s1085 = scalar_lea.sflag [#allocation12], %s1084
          %s1086 = sand.u32 %s172, 1
          %s1087 = smul.addr %s1086, 2
          %s1088 = scalar_lea.vmem [#allocation11], %s1087
          %1090 = dma.done %s1085, 32
        $region76: #{tpu_custom_call.1} parent=67 // pred_fallthru
          _
        // Predicated region
        $region77: #{tpu_custom_call.1} parent=67 // pred_check
          %p1091 = pneg %p213
        $region78: #{tpu_custom_call.1} parent=67 // pred_check_branch
          %1093 = sbr.rel (%p1091) target = $region80
        $region79: #{tpu_custom_call.1} parent=67 // pred_region
          %s1094 = sand.u32 %s34, 1
          %s1095 = scalar_lea.sflag [#allocation12], %s1094
          %s1096 = sand.u32 %s198, 1
          %s1097 = smul.addr %s1096, 2
          %s1098 = scalar_lea.vmem [#allocation13], %s1097
          %1100 = dma.done %s1095, 32
        $region80: #{tpu_custom_call.1} parent=67 // pred_fallthru
          _
      $region68: #{tpu_custom_call.1} parent=5 // pred_fallthru
        _
    $region6: #{tpu_custom_call.1} parent=1 // loop_footer
      %s32 = sadd.s32 1, %s28
    $region7: #{tpu_custom_call.1} parent=1 // loop_footer_branch
      %27 = sbr.rel target = $region3
    $region8: #{tpu_custom_call.1} parent=1 // loop_exit
      _
    %1101 = vsyncpa [#allocation3], 1
    %s1102 = scalar_lea.sflag [#allocation3], 1
    %1103 = vsyncpa %s1102, 1
    %1104 = vsyncpa [#allocation6], 1
    %s1105 = scalar_lea.sflag [#allocation6], 1
    %1106 = vsyncpa %s1105, 1
    %1107 = vsyncpa [#allocation9], 1
    %s1108 = scalar_lea.sflag [#allocation9], 1
    %1109 = vsyncpa %s1108, 1
    %1110 = vsyncpa [#allocation4], 1
    %s1111 = scalar_lea.sflag [#allocation4], 1
    %1112 = vsyncpa %s1111, 1
    %1113 = vsyncpa [#allocation12], 1
    %s1114 = scalar_lea.sflag [#allocation12], 1
    %1115 = vsyncpa %s1114, 1

</llo_original>
